<compile_context>
chip_gen: v6e
topology: v6e:2x2x1
jax: 0.10.0
libtpu: 0.0.40
codegen_flags: <defaults>
</compile_context>

<pallas_src>
import functools
import math

import jax
import jax.numpy as jnp
from jax import lax
from jax.experimental import pallas as pl
from jax.experimental.pallas import tpu as pltpu


# ----------------------------- Fused MHA kernel ----------------------------------------

def _mha_fused_kernel(q_ref, k_ref, v_ref, wq_ref, wk_ref, wv_ref, wo_ref,
                      out_ref, attn_ref, ctx_scratch, *, n_head, attn_dim, scale):
    # q_ref: (1, TQ, H) query tile; k_ref/v_ref: (1, S, H) full key/value for this batch
    # wq/wk/wv_ref: (H, H) head-concatenated projection weights (already transposed)
    # wo_ref: (H, H) transposed output projection
    # out_ref: (1, TQ, H); attn_ref: (1, n_head, TQ, S); ctx_scratch: (TQ, H) VMEM
    x_q = q_ref[0]                                                     # (TQ, H)
    x_k = k_ref[0]                                                     # (S,  H)
    x_v = v_ref[0]                                                     # (S,  H)

    # Fused, lane-dense (H-wide) projections; fold 1/sqrt(A) into q (cheaper than scaling S*S scores).
    q_all = jnp.dot(x_q, wq_ref[...], preferred_element_type=jnp.float32) * scale   # (TQ, H)
    k_all = jnp.dot(x_k, wk_ref[...], preferred_element_type=jnp.float32)           # (S,  H)
    v_all = jnp.dot(x_v, wv_ref[...], preferred_element_type=jnp.float32)           # (S,  H)

    for h in range(n_head):                       # static unroll over heads
        lo = h * attn_dim
        hi = lo + attn_dim
        qh = q_all[:, lo:hi]                      # (TQ, A)
        kh = k_all[:, lo:hi]                      # (S,  A)
        vh = v_all[:, lo:hi]                      # (S,  A)

        # scores = qh @ kh^T, expressed via contracting dims (no materialized transpose)
        scores = lax.dot_general(
            qh, kh, dimension_numbers=(((1,), (1,)), ((), ())),
            preferred_element_type=jnp.float32)                         # (TQ, S)

        # numerically stable softmax over keys
        m = jnp.max(scores, axis=-1, keepdims=True)
        e = jnp.exp(scores - m)
        denom = jnp.sum(e, axis=-1, keepdims=True)
        attn = e * pl.reciprocal(denom, approx=False)                   # (TQ, S)

        attn_ref[0, h] = attn
        ctx_scratch[:, lo:hi] = jnp.dot(attn, vh,
                                        preferred_element_type=jnp.float32)  # (TQ, A)

    # Fused output projection: lane-dense (TQ, H) @ (H, H) -> (TQ, H)
    out_ref[0] = jnp.dot(ctx_scratch[...], wo_ref[...],
                         preferred_element_type=jnp.float32).astype(out_ref.dtype)


# ----------------------------- Wrapper ---------------------------------------------------

def _choose_q_tile(S):
    """Largest lane/sublane-friendly query tile; full S for small sequences."""
    if S <= 512:
        return S
    for t in (512, 256, 128, 64, 32, 16, 8):
        if S % t == 0:
            return t
    return S  # fallback: single tile


def multi_head_attention(query, key, value, wq, wk, wv, wo):
    """
    query/key/value: (B, S, H) float32
    wq, wk, wv: (n_head, A, H)   -- PyTorch Linear layout (out_features, in_features)
    wo: (H, H)                    -- PyTorch Linear layout
    Returns: (output (B, S, H), list of per-head attention scores [(B, S, S)] * n_head)
    """
    B, S, H = query.shape
    n_head, A, _ = wq.shape
    assert n_head * A == H

    scale = 1.0 / math.sqrt(float(A))

    # Head-concatenated, transposed weights: column block h*A:(h+1)*A == wq[h].T
    wq_f = jnp.transpose(wq, (2, 0, 1)).reshape(H, H)   # (H, n_head*A) == (H, H)
    wk_f = jnp.transpose(wk, (2, 0, 1)).reshape(H, H)
    wv_f = jnp.transpose(wv, (2, 0, 1)).reshape(H, H)
    wo_t = wo.T                                         # (H, H)

    TQ = _choose_q_tile(S)
    n_q_tiles = S // TQ

    # VMEM budget (bytes, f32): double-buffered inputs/outputs + weights + scratch, with margin.
    est = 4 * (2 * (TQ + 2 * S) * H          # q tile + k + v (double-buffered)
               + 8 * H * H                   # 4 weight mats (x2 margin)
               + 2 * (TQ * H + n_head * TQ * S)   # out + attn (double-buffered)
               + TQ * H)                     # ctx scratch
    vmem_limit = int(min(max(2 * est, 16 * 2**20), 48 * 2**20))

    kern = functools.partial(_mha_fused_kernel, n_head=n_head, attn_dim=A, scale=scale)

    output, attn = pl.pallas_call(
        kern,
        out_shape=(
            jax.ShapeDtypeStruct((B, S, H), jnp.float32),
            jax.ShapeDtypeStruct((B, n_head, S, S), jnp.float32),
        ),
        grid_spec=pltpu.PrefetchScalarGridSpec(
            num_scalar_prefetch=0,
            grid=(B, n_q_tiles),
            in_specs=[
                pl.BlockSpec((1, TQ, H), lambda b, qi: (b, qi, 0)),   # query tile
                pl.BlockSpec((1, S, H), lambda b, qi: (b, 0, 0)),     # key (full, resident per b)
                pl.BlockSpec((1, S, H), lambda b, qi: (b, 0, 0)),     # value
                pl.BlockSpec((H, H), lambda b, qi: (0, 0)),           # wq fused (resident)
                pl.BlockSpec((H, H), lambda b, qi: (0, 0)),           # wk fused
                pl.BlockSpec((H, H), lambda b, qi: (0, 0)),           # wv fused
                pl.BlockSpec((H, H), lambda b, qi: (0, 0)),           # wo^T
            ],
            out_specs=[
                pl.BlockSpec((1, TQ, H), lambda b, qi: (b, qi, 0)),          # output (lane-dense)
                pl.BlockSpec((1, n_head, TQ, S), lambda b, qi: (b, 0, qi, 0)),  # attention maps
            ],
            scratch_shapes=[pltpu.VMEM((TQ, H), jnp.float32)],
        ),
        compiler_params=pltpu.CompilerParams(
            dimension_semantics=("parallel", "parallel"),
            vmem_limit_bytes=vmem_limit),
    )(query, key, value, wq_f, wk_f, wv_f, wo_t)

    # Match the PyTorch module's return type: Python list of per-head attention maps.
    attentions = [attn[:, h] for h in range(n_head)]
    return output, attentions


# ----------------------------- Reference (pure JAX) for sanity ---------------------------

def _reference(query, key, value, wq, wk, wv, wo):
    B, S, H = query.shape
    n_head, A, _ = wq.shape
    ctxs, attns = [], []
    for h in range(n_head):
        q = query @ wq[h].T
        k = key @ wk[h].T
        v = value @ wv[h].T
        s = jnp.einsum('bqa,bka->bqk', q, k) / jnp.sqrt(jnp.float32(A))
        a = jax.nn.softmax(s, axis=-1)
        ctxs.append(jnp.einsum('bqk,bka->bqa', a, v))
        attns.append(a)
    concat = jnp.concatenate(ctxs, axis=-1)
    return concat @ wo.T, attns


# ----------------------------- Main -------------------------------------------------------

if __name__ == "__main__":
    B, S, H, n_head = 2, 8, 32, 4
    A = H // n_head

    key0 = jax.random.PRNGKey(0)
    kq, kk, kv, kwq, kwk, kwv, kwo = jax.random.split(key0, 7)

    query = jax.random.normal(kq, (B, S, H), dtype=jnp.float32)
    key_ = jax.random.normal(kk, (B, S, H), dtype=jnp.float32)
    value = jax.random.normal(kv, (B, S, H), dtype=jnp.float32)

    # PyTorch Linear layout: (out_features, in_features)
    wq = jax.random.normal(kwq, (n_head, A, H), dtype=jnp.float32) * 0.1
    wk = jax.random.normal(kwk, (n_head, A, H), dtype=jnp.float32) * 0.1
    wv = jax.random.normal(kwv, (n_head, A, H), dtype=jnp.float32) * 0.1
    wo = jax.random.normal(kwo, (H, H), dtype=jnp.float32) * 0.1

    out, attns = multi_head_attention(query, key_, value, wq, wk, wv, wo)
    out = jax.block_until_ready(out)
    attns = [jax.block_until_ready(a) for a in attns]

    ref_out, ref_attns = _reference(query, key_, value, wq, wk, wv, wo)
    assert jnp.allclose(out, ref_out, atol=1e-4, rtol=1e-4), "output mismatch"
    for a, ra in zip(attns, ref_attns):
        assert jnp.allclose(a, ra, atol=1e-5, rtol=1e-5), "attention mismatch"

    print("KERNEL_OK")
</pallas_src>

<mosaic_0001>
module attributes {stable_mosaic.version = 11 : i64} {
  func.func @_mha_fused_kernel(%arg0: i32, %arg1: i32, %arg2: memref<1x8x32xf32, #tpu.memory_space<vmem>>, %arg3: memref<1x8x32xf32, #tpu.memory_space<vmem>>, %arg4: memref<1x8x32xf32, #tpu.memory_space<vmem>>, %arg5: memref<32x32xf32, #tpu.memory_space<vmem>>, %arg6: memref<32x32xf32, #tpu.memory_space<vmem>>, %arg7: memref<32x32xf32, #tpu.memory_space<vmem>>, %arg8: memref<32x32xf32, #tpu.memory_space<vmem>>, %arg9: memref<1x8x32xf32, #tpu.memory_space<vmem>>, %arg10: memref<1x4x8x8xf32, #tpu.memory_space<vmem>>, %arg11: memref<8x32xf32, #tpu.memory_space<vmem>>) attributes {dimension_semantics = [#tpu.dimension_semantics<parallel>, #tpu.dimension_semantics<parallel>], iteration_bounds = array<i64: 2, 1>, scalar_prefetch = 0 : i64, scratch_operands = 1 : i64, tpu.core_type = #tpu.core_type<tc>, window_params = [{transform_indices = @transform_0, window_bounds = array<i64: 1, 8, 32>}, {transform_indices = @transform_1, window_bounds = array<i64: 1, 8, 32>}, {transform_indices = @transform_2, window_bounds = array<i64: 1, 8, 32>}, {pipeline_mode = #tpu.pipeline_mode<synchronous>, transform_indices = @transform_3, window_bounds = array<i64: 32, 32>}, {pipeline_mode = #tpu.pipeline_mode<synchronous>, transform_indices = @transform_4, window_bounds = array<i64: 32, 32>}, {pipeline_mode = #tpu.pipeline_mode<synchronous>, transform_indices = @transform_5, window_bounds = array<i64: 32, 32>}, {pipeline_mode = #tpu.pipeline_mode<synchronous>, transform_indices = @transform_6, window_bounds = array<i64: 32, 32>}, {transform_indices = @transform_7, window_bounds = array<i64: 1, 8, 32>}, {transform_indices = @transform_8, window_bounds = array<i64: 1, 4, 8, 8>}]} {
    %c0 = arith.constant 0 : index
    %c0_0 = arith.constant 0 : index
    %c0_1 = arith.constant 0 : index
    %0 = vector.load %arg2[%c0, %c0_0, %c0_1] : memref<1x8x32xf32, #tpu.memory_space<vmem>>, vector<1x8x32xf32>
    %1 = vector.shape_cast %0 : vector<1x8x32xf32> to vector<8x32xf32>
    %c0_2 = arith.constant 0 : index
    %c0_3 = arith.constant 0 : index
    %c0_4 = arith.constant 0 : index
    %2 = vector.load %arg3[%c0_2, %c0_3, %c0_4] : memref<1x8x32xf32, #tpu.memory_space<vmem>>, vector<1x8x32xf32>
    %3 = vector.shape_cast %2 : vector<1x8x32xf32> to vector<8x32xf32>
    %c0_5 = arith.constant 0 : index
    %c0_6 = arith.constant 0 : index
    %c0_7 = arith.constant 0 : index
    %4 = vector.load %arg4[%c0_5, %c0_6, %c0_7] : memref<1x8x32xf32, #tpu.memory_space<vmem>>, vector<1x8x32xf32>
    %5 = vector.shape_cast %4 : vector<1x8x32xf32> to vector<8x32xf32>
    %c0_8 = arith.constant 0 : index
    %c0_9 = arith.constant 0 : index
    %6 = vector.load %arg5[%c0_8, %c0_9] : memref<32x32xf32, #tpu.memory_space<vmem>>, vector<32x32xf32>
    %cst = arith.constant dense<0.000000e+00> : vector<8x32xf32>
    %7 = tpu.matmul %1, %6, %cst {dimension_numbers = #tpu.dot_dimension_numbers<[1], [0], [0], [1], [0, 0, 1, 1], [], []>} : vector<8x32xf32>, vector<32x32xf32>, vector<8x32xf32> -> vector<8x32xf32>
    %cst_10 = arith.constant 0.353553385 : f32
    %8 = vector.broadcast %cst_10 : f32 to vector<8x32xf32>
    %9 = arith.mulf %7, %8 : vector<8x32xf32>
    %c0_11 = arith.constant 0 : index
    %c0_12 = arith.constant 0 : index
    %10 = vector.load %arg6[%c0_11, %c0_12] : memref<32x32xf32, #tpu.memory_space<vmem>>, vector<32x32xf32>
    %cst_13 = arith.constant dense<0.000000e+00> : vector<8x32xf32>
    %11 = tpu.matmul %3, %10, %cst_13 {dimension_numbers = #tpu.dot_dimension_numbers<[1], [0], [0], [1], [0, 0, 1, 1], [], []>} : vector<8x32xf32>, vector<32x32xf32>, vector<8x32xf32> -> vector<8x32xf32>
    %c0_14 = arith.constant 0 : index
    %c0_15 = arith.constant 0 : index
    %12 = vector.load %arg7[%c0_14, %c0_15] : memref<32x32xf32, #tpu.memory_space<vmem>>, vector<32x32xf32>
    %cst_16 = arith.constant dense<0.000000e+00> : vector<8x32xf32>
    %13 = tpu.matmul %5, %12, %cst_16 {dimension_numbers = #tpu.dot_dimension_numbers<[1], [0], [0], [1], [0, 0, 1, 1], [], []>} : vector<8x32xf32>, vector<32x32xf32>, vector<8x32xf32> -> vector<8x32xf32>
    %14 = vector.extract_strided_slice %9 {offsets = [0, 0], sizes = [8, 8], strides = [1, 1]} : vector<8x32xf32> to vector<8x8xf32>
    %15 = vector.extract_strided_slice %11 {offsets = [0, 0], sizes = [8, 8], strides = [1, 1]} : vector<8x32xf32> to vector<8x8xf32>
    %16 = vector.extract_strided_slice %13 {offsets = [0, 0], sizes = [8, 8], strides = [1, 1]} : vector<8x32xf32> to vector<8x8xf32>
    %cst_17 = arith.constant dense<0.000000e+00> : vector<8x8xf32>
    %17 = tpu.matmul %14, %15, %cst_17 {dimension_numbers = #tpu.dot_dimension_numbers<[1], [1], [0], [0], [0, 0, 1, 0], [], []>} : vector<8x8xf32>, vector<8x8xf32>, vector<8x8xf32> -> vector<8x8xf32>
    %cst_18 = arith.constant dense<0xFF800000> : vector<8xf32>
    %18 = vector.multi_reduction <maximumf>, %17, %cst_18 [1] : vector<8x8xf32> to vector<8xf32>
    %19 = vector.shape_cast %18 : vector<8xf32> to vector<8x1xf32>
    %20 = vector.broadcast %19 : vector<8x1xf32> to vector<8x8xf32>
    %21 = arith.subf %17, %20 : vector<8x8xf32>
    %22 = math.exp %21 : vector<8x8xf32>
    %cst_19 = arith.constant dense<0.000000e+00> : vector<8xf32>
    %23 = vector.multi_reduction <add>, %22, %cst_19 [1] : vector<8x8xf32> to vector<8xf32>
    %24 = vector.shape_cast %23 : vector<8xf32> to vector<8x1xf32>
    %25 = tpu.reciprocal %24 : vector<8x1xf32> -> vector<8x1xf32>
    %26 = vector.broadcast %25 : vector<8x1xf32> to vector<8x8xf32>
    %27 = arith.mulf %22, %26 : vector<8x8xf32>
    %c0_20 = arith.constant 0 : index
    %c0_21 = arith.constant 0 : index
    %c0_22 = arith.constant 0 : index
    %c0_23 = arith.constant 0 : index
    %28 = vector.load %arg10[%c0_20, %c0_21, %c0_22, %c0_23] : memref<1x4x8x8xf32, #tpu.memory_space<vmem>>, vector<1x1x8x8xf32>
    %29 = vector.shape_cast %28 : vector<1x1x8x8xf32> to vector<8x8xf32>
    %30 = vector.shape_cast %27 : vector<8x8xf32> to vector<1x1x8x8xf32>
    tpu.vector_store %arg10[%c0_20, %c0_21, %c0_22, %c0_23], %30 {strides = array<i32>} : memref<1x4x8x8xf32, #tpu.memory_space<vmem>>, vector<1x1x8x8xf32>,
    %cst_24 = arith.constant dense<0.000000e+00> : vector<8x8xf32>
    %31 = tpu.matmul %27, %16, %cst_24 {dimension_numbers = #tpu.dot_dimension_numbers<[1], [0], [0], [1], [0, 0, 1, 1], [], []>} : vector<8x8xf32>, vector<8x8xf32>, vector<8x8xf32> -> vector<8x8xf32>
    %c0_25 = arith.constant 0 : index
    %c0_26 = arith.constant 0 : index
    %32 = vector.load %arg11[%c0_25, %c0_26] : memref<8x32xf32, #tpu.memory_space<vmem>>, vector<8x8xf32>
    tpu.vector_store %arg11[%c0_25, %c0_26], %31 {strides = array<i32>} : memref<8x32xf32, #tpu.memory_space<vmem>>, vector<8x8xf32>,
    %33 = vector.extract_strided_slice %9 {offsets = [0, 8], sizes = [8, 8], strides = [1, 1]} : vector<8x32xf32> to vector<8x8xf32>
    %34 = vector.extract_strided_slice %11 {offsets = [0, 8], sizes = [8, 8], strides = [1, 1]} : vector<8x32xf32> to vector<8x8xf32>
    %35 = vector.extract_strided_slice %13 {offsets = [0, 8], sizes = [8, 8], strides = [1, 1]} : vector<8x32xf32> to vector<8x8xf32>
    %cst_27 = arith.constant dense<0.000000e+00> : vector<8x8xf32>
    %36 = tpu.matmul %33, %34, %cst_27 {dimension_numbers = #tpu.dot_dimension_numbers<[1], [1], [0], [0], [0, 0, 1, 0], [], []>} : vector<8x8xf32>, vector<8x8xf32>, vector<8x8xf32> -> vector<8x8xf32>
    %cst_28 = arith.constant dense<0xFF800000> : vector<8xf32>
    %37 = vector.multi_reduction <maximumf>, %36, %cst_28 [1] : vector<8x8xf32> to vector<8xf32>
    %38 = vector.shape_cast %37 : vector<8xf32> to vector<8x1xf32>
    %39 = vector.broadcast %38 : vector<8x1xf32> to vector<8x8xf32>
    %40 = arith.subf %36, %39 : vector<8x8xf32>
    %41 = math.exp %40 : vector<8x8xf32>
    %cst_29 = arith.constant dense<0.000000e+00> : vector<8xf32>
    %42 = vector.multi_reduction <add>, %41, %cst_29 [1] : vector<8x8xf32> to vector<8xf32>
    %43 = vector.shape_cast %42 : vector<8xf32> to vector<8x1xf32>
    %44 = tpu.reciprocal %43 : vector<8x1xf32> -> vector<8x1xf32>
    %45 = vector.broadcast %44 : vector<8x1xf32> to vector<8x8xf32>
    %46 = arith.mulf %41, %45 : vector<8x8xf32>
    %c0_30 = arith.constant 0 : index
    %c1 = arith.constant 1 : index
    %c0_31 = arith.constant 0 : index
    %c0_32 = arith.constant 0 : index
    %47 = vector.load %arg10[%c0_30, %c1, %c0_31, %c0_32] : memref<1x4x8x8xf32, #tpu.memory_space<vmem>>, vector<1x1x8x8xf32>
    %48 = vector.shape_cast %47 : vector<1x1x8x8xf32> to vector<8x8xf32>
    %49 = vector.shape_cast %46 : vector<8x8xf32> to vector<1x1x8x8xf32>
    tpu.vector_store %arg10[%c0_30, %c1, %c0_31, %c0_32], %49 {strides = array<i32>} : memref<1x4x8x8xf32, #tpu.memory_space<vmem>>, vector<1x1x8x8xf32>,
    %cst_33 = arith.constant dense<0.000000e+00> : vector<8x8xf32>
    %50 = tpu.matmul %46, %35, %cst_33 {dimension_numbers = #tpu.dot_dimension_numbers<[1], [0], [0], [1], [0, 0, 1, 1], [], []>} : vector<8x8xf32>, vector<8x8xf32>, vector<8x8xf32> -> vector<8x8xf32>
    %c0_34 = arith.constant 0 : index
    %c8 = arith.constant 8 : index
    %51 = vector.load %arg11[%c0_34, %c8] : memref<8x32xf32, #tpu.memory_space<vmem>>, vector<8x8xf32>
    tpu.vector_store %arg11[%c0_34, %c8], %50 {strides = array<i32>} : memref<8x32xf32, #tpu.memory_space<vmem>>, vector<8x8xf32>,
    %52 = vector.extract_strided_slice %9 {offsets = [0, 16], sizes = [8, 8], strides = [1, 1]} : vector<8x32xf32> to vector<8x8xf32>
    %53 = vector.extract_strided_slice %11 {offsets = [0, 16], sizes = [8, 8], strides = [1, 1]} : vector<8x32xf32> to vector<8x8xf32>
    %54 = vector.extract_strided_slice %13 {offsets = [0, 16], sizes = [8, 8], strides = [1, 1]} : vector<8x32xf32> to vector<8x8xf32>
    %cst_35 = arith.constant dense<0.000000e+00> : vector<8x8xf32>
    %55 = tpu.matmul %52, %53, %cst_35 {dimension_numbers = #tpu.dot_dimension_numbers<[1], [1], [0], [0], [0, 0, 1, 0], [], []>} : vector<8x8xf32>, vector<8x8xf32>, vector<8x8xf32> -> vector<8x8xf32>
    %cst_36 = arith.constant dense<0xFF800000> : vector<8xf32>
    %56 = vector.multi_reduction <maximumf>, %55, %cst_36 [1] : vector<8x8xf32> to vector<8xf32>
    %57 = vector.shape_cast %56 : vector<8xf32> to vector<8x1xf32>
    %58 = vector.broadcast %57 : vector<8x1xf32> to vector<8x8xf32>
    %59 = arith.subf %55, %58 : vector<8x8xf32>
    %60 = math.exp %59 : vector<8x8xf32>
    %cst_37 = arith.constant dense<0.000000e+00> : vector<8xf32>
    %61 = vector.multi_reduction <add>, %60, %cst_37 [1] : vector<8x8xf32> to vector<8xf32>
    %62 = vector.shape_cast %61 : vector<8xf32> to vector<8x1xf32>
    %63 = tpu.reciprocal %62 : vector<8x1xf32> -> vector<8x1xf32>
    %64 = vector.broadcast %63 : vector<8x1xf32> to vector<8x8xf32>
    %65 = arith.mulf %60, %64 : vector<8x8xf32>
    %c0_38 = arith.constant 0 : index
    %c2 = arith.constant 2 : index
    %c0_39 = arith.constant 0 : index
    %c0_40 = arith.constant 0 : index
    %66 = vector.load %arg10[%c0_38, %c2, %c0_39, %c0_40] : memref<1x4x8x8xf32, #tpu.memory_space<vmem>>, vector<1x1x8x8xf32>
    %67 = vector.shape_cast %66 : vector<1x1x8x8xf32> to vector<8x8xf32>
    %68 = vector.shape_cast %65 : vector<8x8xf32> to vector<1x1x8x8xf32>
    tpu.vector_store %arg10[%c0_38, %c2, %c0_39, %c0_40], %68 {strides = array<i32>} : memref<1x4x8x8xf32, #tpu.memory_space<vmem>>, vector<1x1x8x8xf32>,
    %cst_41 = arith.constant dense<0.000000e+00> : vector<8x8xf32>
    %69 = tpu.matmul %65, %54, %cst_41 {dimension_numbers = #tpu.dot_dimension_numbers<[1], [0], [0], [1], [0, 0, 1, 1], [], []>} : vector<8x8xf32>, vector<8x8xf32>, vector<8x8xf32> -> vector<8x8xf32>
    %c0_42 = arith.constant 0 : index
    %c16 = arith.constant 16 : index
    %70 = vector.load %arg11[%c0_42, %c16] : memref<8x32xf32, #tpu.memory_space<vmem>>, vector<8x8xf32>
    tpu.vector_store %arg11[%c0_42, %c16], %69 {strides = array<i32>} : memref<8x32xf32, #tpu.memory_space<vmem>>, vector<8x8xf32>,
    %71 = vector.extract_strided_slice %9 {offsets = [0, 24], sizes = [8, 8], strides = [1, 1]} : vector<8x32xf32> to vector<8x8xf32>
    %72 = vector.extract_strided_slice %11 {offsets = [0, 24], sizes = [8, 8], strides = [1, 1]} : vector<8x32xf32> to vector<8x8xf32>
    %73 = vector.extract_strided_slice %13 {offsets = [0, 24], sizes = [8, 8], strides = [1, 1]} : vector<8x32xf32> to vector<8x8xf32>
    %cst_43 = arith.constant dense<0.000000e+00> : vector<8x8xf32>
    %74 = tpu.matmul %71, %72, %cst_43 {dimension_numbers = #tpu.dot_dimension_numbers<[1], [1], [0], [0], [0, 0, 1, 0], [], []>} : vector<8x8xf32>, vector<8x8xf32>, vector<8x8xf32> -> vector<8x8xf32>
    %cst_44 = arith.constant dense<0xFF800000> : vector<8xf32>
    %75 = vector.multi_reduction <maximumf>, %74, %cst_44 [1] : vector<8x8xf32> to vector<8xf32>
    %76 = vector.shape_cast %75 : vector<8xf32> to vector<8x1xf32>
    %77 = vector.broadcast %76 : vector<8x1xf32> to vector<8x8xf32>
    %78 = arith.subf %74, %77 : vector<8x8xf32>
    %79 = math.exp %78 : vector<8x8xf32>
    %cst_45 = arith.constant dense<0.000000e+00> : vector<8xf32>
    %80 = vector.multi_reduction <add>, %79, %cst_45 [1] : vector<8x8xf32> to vector<8xf32>
    %81 = vector.shape_cast %80 : vector<8xf32> to vector<8x1xf32>
    %82 = tpu.reciprocal %81 : vector<8x1xf32> -> vector<8x1xf32>
    %83 = vector.broadcast %82 : vector<8x1xf32> to vector<8x8xf32>
    %84 = arith.mulf %79, %83 : vector<8x8xf32>
    %c0_46 = arith.constant 0 : index
    %c3 = arith.constant 3 : index
    %c0_47 = arith.constant 0 : index
    %c0_48 = arith.constant 0 : index
    %85 = vector.load %arg10[%c0_46, %c3, %c0_47, %c0_48] : memref<1x4x8x8xf32, #tpu.memory_space<vmem>>, vector<1x1x8x8xf32>
    %86 = vector.shape_cast %85 : vector<1x1x8x8xf32> to vector<8x8xf32>
    %87 = vector.shape_cast %84 : vector<8x8xf32> to vector<1x1x8x8xf32>
    tpu.vector_store %arg10[%c0_46, %c3, %c0_47, %c0_48], %87 {strides = array<i32>} : memref<1x4x8x8xf32, #tpu.memory_space<vmem>>, vector<1x1x8x8xf32>,
    %cst_49 = arith.constant dense<0.000000e+00> : vector<8x8xf32>
    %88 = tpu.matmul %84, %73, %cst_49 {dimension_numbers = #tpu.dot_dimension_numbers<[1], [0], [0], [1], [0, 0, 1, 1], [], []>} : vector<8x8xf32>, vector<8x8xf32>, vector<8x8xf32> -> vector<8x8xf32>
    %c0_50 = arith.constant 0 : index
    %c24 = arith.constant 24 : index
    %89 = vector.load %arg11[%c0_50, %c24] : memref<8x32xf32, #tpu.memory_space<vmem>>, vector<8x8xf32>
    tpu.vector_store %arg11[%c0_50, %c24], %88 {strides = array<i32>} : memref<8x32xf32, #tpu.memory_space<vmem>>, vector<8x8xf32>,
    %c0_51 = arith.constant 0 : index
    %c0_52 = arith.constant 0 : index
    %90 = vector.load %arg11[%c0_51, %c0_52] : memref<8x32xf32, #tpu.memory_space<vmem>>, vector<8x32xf32>
    %c0_53 = arith.constant 0 : index
    %c0_54 = arith.constant 0 : index
    %91 = vector.load %arg8[%c0_53, %c0_54] : memref<32x32xf32, #tpu.memory_space<vmem>>, vector<32x32xf32>
    %cst_55 = arith.constant dense<0.000000e+00> : vector<8x32xf32>
    %92 = tpu.matmul %90, %91, %cst_55 {dimension_numbers = #tpu.dot_dimension_numbers<[1], [0], [0], [1], [0, 0, 1, 1], [], []>} : vector<8x32xf32>, vector<32x32xf32>, vector<8x32xf32> -> vector<8x32xf32>
    %c0_56 = arith.constant 0 : index
    %c0_57 = arith.constant 0 : index
    %c0_58 = arith.constant 0 : index
    %93 = vector.load %arg9[%c0_56, %c0_57, %c0_58] : memref<1x8x32xf32, #tpu.memory_space<vmem>>, vector<1x8x32xf32>
    %94 = vector.shape_cast %93 : vector<1x8x32xf32> to vector<8x32xf32>
    %95 = vector.shape_cast %92 : vector<8x32xf32> to vector<1x8x32xf32>
    tpu.vector_store %arg9[%c0_56, %c0_57, %c0_58], %95 {strides = array<i32>} : memref<1x8x32xf32, #tpu.memory_space<vmem>>, vector<1x8x32xf32>,
    return
  }
  func.func @transform_0(%arg0: i32, %arg1: i32) -> (i32, i32, i32) {
    %c0_i32 = arith.constant 0 : i32
    %c0_i32_0 = arith.constant 0 : i32
    return %arg0, %arg1, %c0_i32 : i32, i32, i32
  }
  func.func @transform_1(%arg0: i32, %arg1: i32) -> (i32, i32, i32) {
    %c0_i32 = arith.constant 0 : i32
    %c0_i32_0 = arith.constant 0 : i32
    %c0_i32_1 = arith.constant 0 : i32
    return %arg0, %c0_i32, %c0_i32_0 : i32, i32, i32
  }
  func.func @transform_2(%arg0: i32, %arg1: i32) -> (i32, i32, i32) {
    %c0_i32 = arith.constant 0 : i32
    %c0_i32_0 = arith.constant 0 : i32
    %c0_i32_1 = arith.constant 0 : i32
    return %arg0, %c0_i32, %c0_i32_0 : i32, i32, i32
  }
  func.func @transform_3(%arg0: i32, %arg1: i32) -> (i32, i32) {
    %c0_i32 = arith.constant 0 : i32
    %c0_i32_0 = arith.constant 0 : i32
    %c0_i32_1 = arith.constant 0 : i32
    return %c0_i32, %c0_i32_0 : i32, i32
  }
  func.func @transform_4(%arg0: i32, %arg1: i32) -> (i32, i32) {
    %c0_i32 = arith.constant 0 : i32
    %c0_i32_0 = arith.constant 0 : i32
    %c0_i32_1 = arith.constant 0 : i32
    return %c0_i32, %c0_i32_0 : i32, i32
  }
  func.func @transform_5(%arg0: i32, %arg1: i32) -> (i32, i32) {
    %c0_i32 = arith.constant 0 : i32
    %c0_i32_0 = arith.constant 0 : i32
    %c0_i32_1 = arith.constant 0 : i32
    return %c0_i32, %c0_i32_0 : i32, i32
  }
  func.func @transform_6(%arg0: i32, %arg1: i32) -> (i32, i32) {
    %c0_i32 = arith.constant 0 : i32
    %c0_i32_0 = arith.constant 0 : i32
    %c0_i32_1 = arith.constant 0 : i32
    return %c0_i32, %c0_i32_0 : i32, i32
  }
  func.func @transform_7(%arg0: i32, %arg1: i32) -> (i32, i32, i32) {
    %c0_i32 = arith.constant 0 : i32
    %c0_i32_0 = arith.constant 0 : i32
    return %arg0, %arg1, %c0_i32 : i32, i32, i32
  }
  func.func @transform_8(%arg0: i32, %arg1: i32) -> (i32, i32, i32, i32) {
    %c0_i32 = arith.constant 0 : i32
    %c0_i32_0 = arith.constant 0 : i32
    %c0_i32_1 = arith.constant 0 : i32
    return %arg0, %c0_i32, %arg1, %c0_i32_0 : i32, i32, i32, i32
  }
}

</mosaic_0001>

<llo_original>
// kernel: tpu_custom_call.1
$region0: #{tpu_custom_call.1}
  #allocation0 [shape = 'u32[]', space=smem, size = 0x4, offset = 0x4, fixed_abs, tag = 'smem constant byte address 0x4 - core index']
  #allocation1 [shape = 'u32[144,128]{1,0:T(1,128)}', space=vmem, size = 0x12000, scoped, tag = 'internal scratch']
  #allocation2 [shape = 'f32[8,32]{1,0:T(8,128)}', space=vmem, size = 0x1000, scoped, tag = 'scratch operand']
  %s0 = inlined_call_operand.hbm [shape: f32[2,8,32], index: 0, kind: input, shape index: {}]
  %s1 = inlined_call_operand.hbm [shape: f32[2,8,32], index: 1, kind: input, shape index: {}]
  %s2 = inlined_call_operand.hbm [shape: f32[2,8,32], index: 2, kind: input, shape index: {}]
  %s3 = inlined_call_operand.hbm [shape: f32[32,32], index: 3, kind: input, shape index: {}]
  %s4 = inlined_call_operand.hbm [shape: f32[32,32], index: 4, kind: input, shape index: {}]
  %s5 = inlined_call_operand.hbm [shape: f32[32,32], index: 5, kind: input, shape index: {}]
  %s6 = inlined_call_operand.hbm [shape: f32[32,32], index: 6, kind: input, shape index: {}]
  %s7 = inlined_call_operand.hbm [shape: f32[2,8,32], index: 7, kind: output, shape index: {0}]
  %s8 = inlined_call_operand.hbm [shape: f32[2,4,8,8], index: 8, kind: output, shape index: {1}]
  %9 = xla_tuple %s7, %s8
  %s10 = sld [smem:[#allocation0]]
  $region97: #{tpu_custom_call.1} parent=0
    _
  %s12 = ssub.s32 1, %s10
  %s13 = scalar_select 0, %s12, %s10
  $region1: #{tpu_custom_call.1} parent=0
    #allocation3 [shape = 'u8[8192]{0}', space=vmem, size = 0x2000, scoped, tag = 'input window, operand 0']
    #allocation4 [shape = 's32[2]{0}', space=sflag, size = 0x8, scoped, tag = 'scoped memory for tpu_custom_call.1']
    #allocation5 [shape = 's32[2]{0}', space=sflag, size = 0x8, scoped, tag = 'scoped memory for tpu_custom_call.1']
    #allocation6 [shape = 'u8[8192]{0}', space=vmem, size = 0x2000, scoped, tag = 'input window, operand 1']
    #allocation7 [shape = 's32[2]{0}', space=sflag, size = 0x8, scoped, tag = 'scoped memory for tpu_custom_call.1']
    #allocation8 [shape = 'u8[8192]{0}', space=vmem, size = 0x2000, scoped, tag = 'input window, operand 2']
    #allocation9 [shape = 'u8[16384]{0}', space=vmem, size = 0x4000, scoped, tag = 'input window, operand 3, single buffered']
    #allocation10 [shape = 's32[1]{0}', space=sflag, size = 0x4, scoped, tag = 'scoped memory for tpu_custom_call.1']
    #allocation11 [shape = 'u8[16384]{0}', space=vmem, size = 0x4000, scoped, tag = 'input window, operand 4, single buffered']
    #allocation12 [shape = 'u8[16384]{0}', space=vmem, size = 0x4000, scoped, tag = 'input window, operand 5, single buffered']
    #allocation13 [shape = 's32[1]{0}', space=sflag, size = 0x4, scoped, tag = 'scoped memory for tpu_custom_call.1']
    #allocation14 [shape = 'u8[16384]{0}', space=vmem, size = 0x4000, scoped, tag = 'input window, operand 6, single buffered']
    #allocation15 [shape = 'u8[8192]{0}', space=vmem, size = 0x2000, scoped, tag = 'output window, operand 0']
    #allocation16 [shape = 'u8[32768]{0}', space=vmem, size = 0x8000, scoped, tag = 'output window, operand 1']
    #allocation17 [shape = 's32[2]{0}', space=sflag, size = 0x8, scoped, tag = 'scoped memory for tpu_custom_call.1']
    %14 = vsyncpa [#allocation4], 0
    %s15 = scalar_lea.sflag [#allocation4], 1
    %16 = vsyncpa %s15, 0
    %17 = vsyncpa [#allocation7], 0
    %s18 = scalar_lea.sflag [#allocation7], 1
    %19 = vsyncpa %s18, 0
    %20 = vsyncpa [#allocation10], 0
    %21 = vsyncpa [#allocation13], 0
    %22 = vsyncpa [#allocation5], 0
    %s23 = scalar_lea.sflag [#allocation5], 1
    %24 = vsyncpa %s23, 0
    %25 = vsyncpa [#allocation17], 0
    %s26 = scalar_lea.sflag [#allocation17], 1
    %27 = vsyncpa %s26, 0
    loop: start=0, step=1, limit=4
    $region2: #{tpu_custom_call.1} parent=1 // loop_pre_header
      _
    $region3: #{tpu_custom_call.1} parent=1 // loop_header
      %s29 = sphi 0, %s33
      %p30 = scmp.ge.s32.totalorder %s29, 4
      %s36 = sphi 0, %s48
      %s37 = sphi 0, %s44
      %s38 = sphi 0, %s36
      %s39 = sphi 0, %s37
      %s40 = sphi 0, %s38
      %s41 = sphi 0, %s39
      %s53 = sphi 0, %s55
      %s56 = sphi 0, %s53
      %s57 = sphi 0, %s56
      %s73 = sphi 0, %s57
      %s79 = sphi 0, %s81
      %s82 = sphi 0, %s79
      %s83 = sphi 0, %s82
      %s99 = sphi 0, %s83
      %s105 = sphi 0, %s107
      %s108 = sphi 0, %s105
      %s109 = sphi 0, %s108
      %s125 = sphi 0, %s109
      %s129 = sphi 0, %s129
      %s131 = sphi 0, %s129
      %s132 = sphi 0, %s131
      %s146 = sphi 0, %s132
      %s150 = sphi 0, %s150
      %s152 = sphi 0, %s150
      %s153 = sphi 0, %s152
      %s167 = sphi 0, %s153
      %s171 = sphi 0, %s171
      %s173 = sphi 0, %s171
      %s174 = sphi 0, %s173
      %s188 = sphi 0, %s174
      %s192 = sphi 0, %s192
      %s194 = sphi 0, %s192
      %s195 = sphi 0, %s194
      %s209 = sphi 0, %s195
      %s217 = sphi 0, %s219
      %s220 = sphi 0, %s217
      %s221 = sphi 0, %s220
      %s237 = sphi 0, %s221
      %s245 = sphi 0, %s247
      %s248 = sphi 0, %s245
      %s249 = sphi 0, %s248
      %s265 = sphi 0, %s249
    $region4: #{tpu_custom_call.1} parent=1 // loop_header_branch
      %32 = sbr.rel (%p30) target = $region8
    $region5: #{tpu_custom_call.1} parent=1 // loop_body
      %s34 = ssub.s32 %s29, 1
      %s35 = ssub.s32 %s29, 2
      %s42 = sadd.s32 1, %s37
      %p43 = scmp.ge.s32.totalorder %s42, 1
      %s44 = scalar_select %p43, 0, %s42
      %s45 = sadd.s32 1, %s36
      %s46 = scalar_select %p43, %s45, %s36
      %p47 = scmp.ge.s32.totalorder %s46, 2
      %s48 = scalar_select %p47, 0, %s46
      %s49 = ssub.s32 %s36, %s48
      %s50 = ssub.s32 %s37, %s44
      %s51 = sor.u32 %s49, %s50
      %p52 = scmp.eq.s32.totalorder %s51, 0
      %s54 = sadd.s32 %s53, 1
      %s55 = scalar_select %p52, %s53, %s54
      %p58 = pneg %p52
      %p59 = scmp.eq.s32.totalorder %s29, 1
      %p60 = por %p58, %p59
      %p61 = scmp.ne.s32.totalorder %s53, %s56
      %p62 = scmp.eq.s32.totalorder %s29, 0
      %p63 = por %p61, %p62
      %p64 = scmp.ne.s32.totalorder %s53, %s56
      %p65 = scmp.eq.s32.totalorder %s34, 1
      %p66 = por %p64, %p65
      %p67 = scmp.ne.s32.totalorder %s56, %s57
      %p68 = scmp.eq.s32.totalorder %s34, 0
      %p69 = por %p67, %p68
      %p70 = scmp.ne.s32.totalorder %s56, %s57
      %p71 = scmp.eq.s32.totalorder %s35, 1
      %p72 = por %p70, %p71
      %p74 = scmp.ne.s32.totalorder %s57, %s73
      %p75 = scmp.eq.s32.totalorder %s35, 0
      %p76 = por %p74, %p75
      %s77 = ssub.s32 %s36, %s48
      %p78 = scmp.eq.s32.totalorder %s77, 0
      %s80 = sadd.s32 %s79, 1
      %s81 = scalar_select %p78, %s79, %s80
      %p84 = pneg %p78
      %p85 = scmp.eq.s32.totalorder %s29, 1
      %p86 = por %p84, %p85
      %p87 = scmp.ne.s32.totalorder %s79, %s82
      %p88 = scmp.eq.s32.totalorder %s29, 0
      %p89 = por %p87, %p88
      %p90 = scmp.ne.s32.totalorder %s79, %s82
      %p91 = scmp.eq.s32.totalorder %s34, 1
      %p92 = por %p90, %p91
      %p93 = scmp.ne.s32.totalorder %s82, %s83
      %p94 = scmp.eq.s32.totalorder %s34, 0
      %p95 = por %p93, %p94
      %p96 = scmp.ne.s32.totalorder %s82, %s83
      %p97 = scmp.eq.s32.totalorder %s35, 1
      %p98 = por %p96, %p97
      %p100 = scmp.ne.s32.totalorder %s83, %s99
      %p101 = scmp.eq.s32.totalorder %s35, 0
      %p102 = por %p100, %p101
      %s103 = ssub.s32 %s36, %s48
      %p104 = scmp.eq.s32.totalorder %s103, 0
      %s106 = sadd.s32 %s105, 1
      %s107 = scalar_select %p104, %s105, %s106
      %p110 = pneg %p104
      %p111 = scmp.eq.s32.totalorder %s29, 1
      %p112 = por %p110, %p111
      %p113 = scmp.ne.s32.totalorder %s105, %s108
      %p114 = scmp.eq.s32.totalorder %s29, 0
      %p115 = por %p113, %p114
      %p116 = scmp.ne.s32.totalorder %s105, %s108
      %p117 = scmp.eq.s32.totalorder %s34, 1
      %p118 = por %p116, %p117
      %p119 = scmp.ne.s32.totalorder %s108, %s109
      %p120 = scmp.eq.s32.totalorder %s34, 0
      %p121 = por %p119, %p120
      %p122 = scmp.ne.s32.totalorder %s108, %s109
      %p123 = scmp.eq.s32.totalorder %s35, 1
      %p124 = por %p122, %p123
      %p126 = scmp.ne.s32.totalorder %s109, %s125
      %p127 = scmp.eq.s32.totalorder %s35, 0
      %p128 = por %p126, %p127
      %s130 = sadd.s32 %s129, 1
      %p133 = scmp.eq.s32.totalorder %s29, 1
      %p134 = scmp.ne.s32.totalorder %s129, %s131
      %p135 = scmp.eq.s32.totalorder %s29, 0
      %p136 = por %p134, %p135
      %p137 = scmp.ne.s32.totalorder %s129, %s131
      %p138 = scmp.eq.s32.totalorder %s34, 1
      %p139 = por %p137, %p138
      %p140 = scmp.ne.s32.totalorder %s131, %s132
      %p141 = scmp.eq.s32.totalorder %s34, 0
      %p142 = por %p140, %p141
      %p143 = scmp.ne.s32.totalorder %s131, %s132
      %p144 = scmp.eq.s32.totalorder %s35, 1
      %p145 = por %p143, %p144
      %p147 = scmp.ne.s32.totalorder %s132, %s146
      %p148 = scmp.eq.s32.totalorder %s35, 0
      %p149 = por %p147, %p148
      %s151 = sadd.s32 %s150, 1
      %p154 = scmp.eq.s32.totalorder %s29, 1
      %p155 = scmp.ne.s32.totalorder %s150, %s152
      %p156 = scmp.eq.s32.totalorder %s29, 0
      %p157 = por %p155, %p156
      %p158 = scmp.ne.s32.totalorder %s150, %s152
      %p159 = scmp.eq.s32.totalorder %s34, 1
      %p160 = por %p158, %p159
      %p161 = scmp.ne.s32.totalorder %s152, %s153
      %p162 = scmp.eq.s32.totalorder %s34, 0
      %p163 = por %p161, %p162
      %p164 = scmp.ne.s32.totalorder %s152, %s153
      %p165 = scmp.eq.s32.totalorder %s35, 1
      %p166 = por %p164, %p165
      %p168 = scmp.ne.s32.totalorder %s153, %s167
      %p169 = scmp.eq.s32.totalorder %s35, 0
      %p170 = por %p168, %p169
      %s172 = sadd.s32 %s171, 1
      %p175 = scmp.eq.s32.totalorder %s29, 1
      %p176 = scmp.ne.s32.totalorder %s171, %s173
      %p177 = scmp.eq.s32.totalorder %s29, 0
      %p178 = por %p176, %p177
      %p179 = scmp.ne.s32.totalorder %s171, %s173
      %p180 = scmp.eq.s32.totalorder %s34, 1
      %p181 = por %p179, %p180
      %p182 = scmp.ne.s32.totalorder %s173, %s174
      %p183 = scmp.eq.s32.totalorder %s34, 0
      %p184 = por %p182, %p183
      %p185 = scmp.ne.s32.totalorder %s173, %s174
      %p186 = scmp.eq.s32.totalorder %s35, 1
      %p187 = por %p185, %p186
      %p189 = scmp.ne.s32.totalorder %s174, %s188
      %p190 = scmp.eq.s32.totalorder %s35, 0
      %p191 = por %p189, %p190
      %s193 = sadd.s32 %s192, 1
      %p196 = scmp.eq.s32.totalorder %s29, 1
      %p197 = scmp.ne.s32.totalorder %s192, %s194
      %p198 = scmp.eq.s32.totalorder %s29, 0
      %p199 = por %p197, %p198
      %p200 = scmp.ne.s32.totalorder %s192, %s194
      %p201 = scmp.eq.s32.totalorder %s34, 1
      %p202 = por %p200, %p201
      %p203 = scmp.ne.s32.totalorder %s194, %s195
      %p204 = scmp.eq.s32.totalorder %s34, 0
      %p205 = por %p203, %p204
      %p206 = scmp.ne.s32.totalorder %s194, %s195
      %p207 = scmp.eq.s32.totalorder %s35, 1
      %p208 = por %p206, %p207
      %p210 = scmp.ne.s32.totalorder %s195, %s209
      %p211 = scmp.eq.s32.totalorder %s35, 0
      %p212 = por %p210, %p211
      %s213 = ssub.s32 %s36, %s48
      %s214 = ssub.s32 %s37, %s44
      %s215 = sor.u32 %s213, %s214
      %p216 = scmp.eq.s32.totalorder %s215, 0
      %s218 = sadd.s32 %s217, 1
      %s219 = scalar_select %p216, %s217, %s218
      %p222 = pneg %p216
      %p223 = scmp.eq.s32.totalorder %s29, 1
      %p224 = por %p222, %p223
      %p225 = scmp.ne.s32.totalorder %s217, %s220
      %p226 = scmp.eq.s32.totalorder %s29, 0
      %p227 = por %p225, %p226
      %p228 = scmp.ne.s32.totalorder %s217, %s220
      %p229 = scmp.eq.s32.totalorder %s34, 1
      %p230 = por %p228, %p229
      %p231 = scmp.ne.s32.totalorder %s220, %s221
      %p232 = scmp.eq.s32.totalorder %s34, 0
      %p233 = por %p231, %p232
      %p234 = scmp.ne.s32.totalorder %s220, %s221
      %p235 = scmp.eq.s32.totalorder %s35, 1
      %p236 = por %p234, %p235
      %p238 = scmp.ne.s32.totalorder %s221, %s237
      %p239 = scmp.eq.s32.totalorder %s35, 0
      %p240 = por %p238, %p239
      %s241 = ssub.s32 %s36, %s48
      %s242 = ssub.s32 %s37, %s44
      %s243 = sor.u32 %s241, %s242
      %p244 = scmp.eq.s32.totalorder %s243, 0
      %s246 = sadd.s32 %s245, 1
      %s247 = scalar_select %p244, %s245, %s246
      %p250 = pneg %p244
      %p251 = scmp.eq.s32.totalorder %s29, 1
      %p252 = por %p250, %p251
      %p253 = scmp.ne.s32.totalorder %s245, %s248
      %p254 = scmp.eq.s32.totalorder %s29, 0
      %p255 = por %p253, %p254
      %p256 = scmp.ne.s32.totalorder %s245, %s248
      %p257 = scmp.eq.s32.totalorder %s34, 1
      %p258 = por %p256, %p257
      %p259 = scmp.ne.s32.totalorder %s248, %s249
      %p260 = scmp.eq.s32.totalorder %s34, 0
      %p261 = por %p259, %p260
      %p262 = scmp.ne.s32.totalorder %s248, %s249
      %p263 = scmp.eq.s32.totalorder %s35, 1
      %p264 = por %p262, %p263
      %p266 = scmp.ne.s32.totalorder %s249, %s265
      %p267 = scmp.eq.s32.totalorder %s35, 0
      %p268 = por %p266, %p267
      %p269 = scmp.le.s32.totalorder 1, %s29
      %p270 = scmp.lt.s32.totalorder %s29, 3
      %p271 = pnand %p269, %p270
      %p272 = pneg %p271
      // Predicated region
      $region9: #{tpu_custom_call.1} parent=5 // pred_check
        _
      $region10: #{tpu_custom_call.1} parent=5 // pred_check_branch
        %274 = sbr.rel (%p271) target = $region12
      $region11: #{tpu_custom_call.1} parent=5 // pred_region
        %s275 = ssub.s32 %s29, 1
        // Predicated region
        $region13: #{tpu_custom_call.1} parent=11 // pred_check
          %p276 = pneg %p142
        $region14: #{tpu_custom_call.1} parent=11 // pred_check_branch
          %278 = sbr.rel (%p276) target = $region16
        $region15: #{tpu_custom_call.1} parent=11 // pred_region
          %s280 = ssub.s32 512, 512
          %281 = vsyncadd [#allocation10], %s280
          %s282 = sshll.u32 [#allocation9], 4
          %s283 = int_to_ptr.vmem [resolvable:$true] %s282
          %288 = dma.hbm_to_vmem [thread:$0]  %s3, 512, %s283, [#allocation10], 128, 128, 8
        $region16: #{tpu_custom_call.1} parent=11 // pred_fallthru
          _
        // Predicated region
        $region17: #{tpu_custom_call.1} parent=11 // pred_check
          %p289 = pneg %p163
        $region18: #{tpu_custom_call.1} parent=11 // pred_check_branch
          %291 = sbr.rel (%p289) target = $region20
        $region19: #{tpu_custom_call.1} parent=11 // pred_region
          %s293 = ssub.s32 512, 512
          %294 = vsyncadd [#allocation10], %s293
          %s295 = sshll.u32 [#allocation11], 4
          %s296 = int_to_ptr.vmem [resolvable:$true] %s295
          %301 = dma.hbm_to_vmem [thread:$0]  %s4, 512, %s296, [#allocation10], 128, 128, 8
        $region20: #{tpu_custom_call.1} parent=11 // pred_fallthru
          _
        // Predicated region
        $region21: #{tpu_custom_call.1} parent=11 // pred_check
          %p302 = pneg %p184
        $region22: #{tpu_custom_call.1} parent=11 // pred_check_branch
          %304 = sbr.rel (%p302) target = $region24
        $region23: #{tpu_custom_call.1} parent=11 // pred_region
          %s306 = ssub.s32 512, 512
          %307 = vsyncadd [#allocation13], %s306
          %s308 = sshll.u32 [#allocation12], 4
          %s309 = int_to_ptr.vmem [resolvable:$true] %s308
          %314 = dma.hbm_to_vmem [thread:$0]  %s5, 512, %s309, [#allocation13], 128, 128, 8
        $region24: #{tpu_custom_call.1} parent=11 // pred_fallthru
          _
        // Predicated region
        $region25: #{tpu_custom_call.1} parent=11 // pred_check
          %p315 = pneg %p205
        $region26: #{tpu_custom_call.1} parent=11 // pred_check_branch
          %317 = sbr.rel (%p315) target = $region28
        $region27: #{tpu_custom_call.1} parent=11 // pred_region
          %s319 = ssub.s32 512, 512
          %320 = vsyncadd [#allocation13], %s319
          %s321 = sshll.u32 [#allocation14], 4
          %s322 = int_to_ptr.vmem [resolvable:$true] %s321
          %327 = dma.hbm_to_vmem [thread:$0]  %s6, 512, %s322, [#allocation13], 128, 128, 8
        $region28: #{tpu_custom_call.1} parent=11 // pred_fallthru
          _
      $region12: #{tpu_custom_call.1} parent=5 // pred_fallthru
        _
      %p328 = scmp.lt.s32.totalorder %s29, 2
      // Predicated region
      $region29: #{tpu_custom_call.1} parent=5 // pred_check
        %p329 = pneg %p328
      $region30: #{tpu_custom_call.1} parent=5 // pred_check_branch
        %331 = sbr.rel (%p329) target = $region32
      $region31: #{tpu_custom_call.1} parent=5 // pred_region
        // Predicated region
        $region33: #{tpu_custom_call.1} parent=31 // pred_check
          %p332 = pneg %p63
        $region34: #{tpu_custom_call.1} parent=31 // pred_check_branch
          %334 = sbr.rel (%p332) target = $region36
        $region35: #{tpu_custom_call.1} parent=31 // pred_region
          %s335 = sand.u32 %s53, 1
          %s336 = scalar_lea.sflag [#allocation4], %s335
          %s337 = sand.u32 %s53, 1
          %s338 = smul.addr %s337, 8
          %s339 = scalar_lea.vmem [#allocation3], %s338
          %s341 = ssub.s32 128, 128
          %342 = vsyncadd %s336, %s341
          %s343 = sadd.s32 %s37, %s36
          %s344 = smul.addr %s343, 128
          %s345 = scalar_lea.hbm %s0, %s344
          %s347 = sshll.u32 %s339, 4
          %s348 = int_to_ptr.vmem [resolvable:$true] %s347
          %350 = dma.hbm_to_vmem [thread:$0]  %s345, 128, %s348, %s336
        $region36: #{tpu_custom_call.1} parent=31 // pred_fallthru
          _
        // Predicated region
        $region37: #{tpu_custom_call.1} parent=31 // pred_check
          %p351 = pneg %p89
        $region38: #{tpu_custom_call.1} parent=31 // pred_check_branch
          %353 = sbr.rel (%p351) target = $region40
        $region39: #{tpu_custom_call.1} parent=31 // pred_region
          %s354 = sand.u32 %s29, 1
          %s355 = scalar_lea.sflag [#allocation7], %s354
          %s356 = sand.u32 %s79, 1
          %s357 = smul.addr %s356, 8
          %s358 = scalar_lea.vmem [#allocation6], %s357
          %s360 = ssub.s32 128, 128
          %361 = vsyncadd %s355, %s360
          %s362 = smul.addr %s36, 128
          %s363 = scalar_lea.hbm %s1, %s362
          %s365 = sshll.u32 %s358, 4
          %s366 = int_to_ptr.vmem [resolvable:$true] %s365
          %368 = dma.hbm_to_vmem [thread:$0]  %s363, 128, %s366, %s355
        $region40: #{tpu_custom_call.1} parent=31 // pred_fallthru
          _
        // Predicated region
        $region41: #{tpu_custom_call.1} parent=31 // pred_check
          %p369 = pneg %p115
        $region42: #{tpu_custom_call.1} parent=31 // pred_check_branch
          %371 = sbr.rel (%p369) target = $region44
        $region43: #{tpu_custom_call.1} parent=31 // pred_region
          %s372 = sand.u32 %s29, 1
          %s373 = scalar_lea.sflag [#allocation7], %s372
          %s374 = sand.u32 %s105, 1
          %s375 = smul.addr %s374, 8
          %s376 = scalar_lea.vmem [#allocation8], %s375
          %s378 = ssub.s32 128, 128
          %379 = vsyncadd %s373, %s378
          %s380 = smul.addr %s36, 128
          %s381 = scalar_lea.hbm %s2, %s380
          %s383 = sshll.u32 %s376, 4
          %s384 = int_to_ptr.vmem [resolvable:$true] %s383
          %386 = dma.hbm_to_vmem [thread:$0]  %s381, 128, %s384, %s373
        $region44: #{tpu_custom_call.1} parent=31 // pred_fallthru
          _
      $region32: #{tpu_custom_call.1} parent=5 // pred_fallthru
        _
      %p387 = scmp.le.s32.totalorder 1, %s29
      %p388 = scmp.lt.s32.totalorder %s29, 3
      %p389 = pnand %p387, %p388
      %p390 = pneg %p389
      // Predicated region
      $region45: #{tpu_custom_call.1} parent=5 // pred_check
        _
      $region46: #{tpu_custom_call.1} parent=5 // pred_check_branch
        %392 = sbr.rel (%p389) target = $region48
      $region47: #{tpu_custom_call.1} parent=5 // pred_region
        %s393 = ssub.s32 %s29, 1
        %s394 = sand.u32 %s56, 1
        %s395 = scalar_lea.sflag [#allocation4], %s394
        %s396 = sand.u32 %s56, 1
        %s397 = smul.addr %s396, 8
        %s398 = scalar_lea.vmem [#allocation3], %s397
        // Predicated region
        $region49: #{tpu_custom_call.1} parent=47 // pred_check
          %p399 = pneg %p69
        $region50: #{tpu_custom_call.1} parent=47 // pred_check_branch
          %401 = sbr.rel (%p399) target = $region52
        $region51: #{tpu_custom_call.1} parent=47 // pred_region
          %402 = dma.done %s395, 128
        $region52: #{tpu_custom_call.1} parent=47 // pred_fallthru
          _
        %s403 = sand.u32 %s34, 1
        %s404 = scalar_lea.sflag [#allocation7], %s403
        %s405 = sand.u32 %s82, 1
        %s406 = smul.addr %s405, 8
        %s407 = scalar_lea.vmem [#allocation6], %s406
        // Predicated region
        $region53: #{tpu_custom_call.1} parent=47 // pred_check
          %p408 = pneg %p95
        $region54: #{tpu_custom_call.1} parent=47 // pred_check_branch
          %410 = sbr.rel (%p408) target = $region56
        $region55: #{tpu_custom_call.1} parent=47 // pred_region
          %411 = dma.done %s404, 128
        $region56: #{tpu_custom_call.1} parent=47 // pred_fallthru
          _
        %s412 = sand.u32 %s34, 1
        %s413 = scalar_lea.sflag [#allocation7], %s412
        %s414 = sand.u32 %s108, 1
        %s415 = smul.addr %s414, 8
        %s416 = scalar_lea.vmem [#allocation8], %s415
        // Predicated region
        $region57: #{tpu_custom_call.1} parent=47 // pred_check
          %p417 = pneg %p121
        $region58: #{tpu_custom_call.1} parent=47 // pred_check_branch
          %419 = sbr.rel (%p417) target = $region60
        $region59: #{tpu_custom_call.1} parent=47 // pred_region
          %420 = dma.done %s413, 128
        $region60: #{tpu_custom_call.1} parent=47 // pred_fallthru
          _
        // Predicated region
        $region61: #{tpu_custom_call.1} parent=47 // pred_check
          %p421 = pneg %p142
        $region62: #{tpu_custom_call.1} parent=47 // pred_check_branch
          %423 = sbr.rel (%p421) target = $region64
        $region63: #{tpu_custom_call.1} parent=47 // pred_region
          %424 = dma.done [#allocation10], 512
        $region64: #{tpu_custom_call.1} parent=47 // pred_fallthru
          _
        // Predicated region
        $region65: #{tpu_custom_call.1} parent=47 // pred_check
          %p425 = pneg %p163
        $region66: #{tpu_custom_call.1} parent=47 // pred_check_branch
          %427 = sbr.rel (%p425) target = $region68
        $region67: #{tpu_custom_call.1} parent=47 // pred_region
          %428 = dma.done [#allocation10], 512
        $region68: #{tpu_custom_call.1} parent=47 // pred_fallthru
          _
        // Predicated region
        $region69: #{tpu_custom_call.1} parent=47 // pred_check
          %p429 = pneg %p184
        $region70: #{tpu_custom_call.1} parent=47 // pred_check_branch
          %431 = sbr.rel (%p429) target = $region72
        $region71: #{tpu_custom_call.1} parent=47 // pred_region
          %432 = dma.done [#allocation13], 512
        $region72: #{tpu_custom_call.1} parent=47 // pred_fallthru
          _
        // Predicated region
        $region73: #{tpu_custom_call.1} parent=47 // pred_check
          %p433 = pneg %p205
        $region74: #{tpu_custom_call.1} parent=47 // pred_check_branch
          %435 = sbr.rel (%p433) target = $region76
        $region75: #{tpu_custom_call.1} parent=47 // pred_region
          %436 = dma.done [#allocation13], 512
        $region76: #{tpu_custom_call.1} parent=47 // pred_fallthru
          _
        %s437 = sand.u32 %s56, 1
        %s438 = scalar_lea.sflag [#allocation4], %s437
        %s439 = sand.u32 %s56, 1
        %s440 = smul.addr %s439, 8
        %s441 = scalar_lea.vmem [#allocation3], %s440
        %p442 = pneg %p69
        %p443 = pneg %p66
        %s444 = sand.u32 %s34, 1
        %s445 = scalar_lea.sflag [#allocation7], %s444
        %s446 = sand.u32 %s82, 1
        %s447 = smul.addr %s446, 8
        %s448 = scalar_lea.vmem [#allocation6], %s447
        %p449 = pneg %p95
        %p450 = pneg %p92
        %s451 = sand.u32 %s34, 1
        %s452 = scalar_lea.sflag [#allocation7], %s451
        %s453 = sand.u32 %s108, 1
        %s454 = smul.addr %s453, 8
        %s455 = scalar_lea.vmem [#allocation8], %s454
        %p456 = pneg %p121
        %p457 = pneg %p118
        %p458 = pneg %p142
        %p459 = pneg %p139
        %p460 = pneg %p163
        %p461 = pneg %p160
        %p462 = pneg %p184
        %p463 = pneg %p181
        %p464 = pneg %p205
        %p465 = pneg %p202
        %p466 = pneg %p233
        %p467 = pneg %p230
        %s468 = sand.u32 %s220, 1
        %s469 = scalar_lea.sflag [#allocation5], %s468
        %s470 = sand.u32 %s220, 1
        %s471 = smul.addr %s470, 8
        %s472 = scalar_lea.vmem [#allocation15], %s471
        %p473 = pneg %p261
        %p474 = pneg %p258
        %s475 = sand.u32 %s248, 1
        %s476 = scalar_lea.sflag [#allocation17], %s475
        %s477 = sand.u32 %s248, 1
        %s478 = smul.addr %s477, 32
        %s479 = scalar_lea.vmem [#allocation16], %s478
        %v480 = vld [vmem:[%s398] sm:$0xff]
        %v481 = vld [vmem:[%s407] sm:$0xff]
        %v482 = vld [vmem:[%s416] sm:$0xff]
        %v483 = vld [vmem:[#allocation9] sm:$0xff]
        %v484 = vld [vmem:[#allocation9 + $0x8] sm:$0xff]
        %v485 = vld [vmem:[#allocation9 + $0x10] sm:$0xff]
        %v486 = vld [vmem:[#allocation9 + $0x18] sm:$0xff]
        %vm487 = vcmask 261120
        %v489 = vsel %vm487, %v480, 0
        %491 = vmatprep.subr.mxu0 0.0
        %492 = vmatpush1.msra.mxu0 0.0
        %493 = vmatprep.subr.mxu0 0.0
        %494 = vmatpush1.msra.mxu0 0.0
        %495 = vmatprep.subr.mxu0 0.0
        %496 = vmatpush1.msra.mxu0 0.0
        %497 = vmatprep.subr.mxu0 0.0
        %498 = vmatpush1.msra.mxu0 0.0
        %499 = vmatprep.subr.mxu0 0.0
        %500 = vmatpush1.msra.mxu0 0.0
        %501 = vmatprep.subr.mxu0 0.0
        %502 = vmatpush1.msra.mxu0 0.0
        %503 = vmatprep.subr.mxu0 0.0
        %504 = vmatpush1.msra.mxu0 0.0
        %505 = vmatprep.subr.mxu0 0.0
        %506 = vmatpush1.msra.mxu0 0.0
        %507 = vmatprep.subr.mxu0 0.0
        %508 = vmatpush1.msra.mxu0 0.0
        %509 = vmatprep.subr.mxu0 0.0
        %510 = vmatpush1.msra.mxu0 0.0
        %511 = vmatprep.subr.mxu0 0.0
        %512 = vmatpush1.msra.mxu0 0.0
        %513 = vmatprep.subr.mxu0 0.0
        %514 = vmatpush1.msra.mxu0 0.0
        %515 = vmatprep.subr.mxu0 0.0
        %516 = vmatpush1.msra.mxu0 %v486
        %517 = vmatprep.subr.mxu0 0.0
        %518 = vmatpush1.msra.mxu0 %v485
        %519 = vmatprep.subr.mxu0 0.0
        %520 = vmatpush1.msra.mxu0 %v484
        %521 = vmatprep.subr.mxu0 0.0
        %522 = vmatpush1.msra.mxu0 %v483
        %523 = vmatprep.subr.mxu0 0.0
        %524 = vmatpush2.msra.mxu0 0.0
        %525 = vmatprep.subr.mxu0 0.0
        %526 = vmatpush2.msra.mxu0 0.0
        %527 = vmatprep.subr.mxu0 0.0
        %528 = vmatpush2.msra.mxu0 0.0
        %529 = vmatprep.subr.mxu0 0.0
        %530 = vmatpush2.msra.mxu0 0.0
        %531 = vmatprep.subr.mxu0 0.0
        %532 = vmatpush2.msra.mxu0 0.0
        %533 = vmatprep.subr.mxu0 0.0
        %534 = vmatpush2.msra.mxu0 0.0
        %535 = vmatprep.subr.mxu0 0.0
        %536 = vmatpush2.msra.mxu0 0.0
        %537 = vmatprep.subr.mxu0 0.0
        %538 = vmatpush2.msra.mxu0 0.0
        %539 = vmatprep.subr.mxu0 0.0
        %540 = vmatpush2.msra.mxu0 0.0
        %541 = vmatprep.subr.mxu0 0.0
        %542 = vmatpush2.msra.mxu0 0.0
        %543 = vmatprep.subr.mxu0 0.0
        %544 = vmatpush2.msra.mxu0 0.0
        %545 = vmatprep.subr.mxu0 0.0
        %546 = vmatpush2.msra.mxu0 0.0
        %547 = vmatprep.subr.mxu0 0.0
        %548 = vmatpush2.msra.mxu0 0.0
        %549 = vmatprep.subr.mxu0 0.0
        %550 = vmatpush2.msra.mxu0 0.0
        %551 = vmatprep.subr.mxu0 0.0
        %552 = vmatpush2.msra.mxu0 0.0
        %553 = vmatprep.subr.mxu0 0.0
        %554 = vmatpush2.msra.mxu0 0.0
        %555 = vmatprep.mubr.f32.mxu0 0.0
        %556 = vmatmul.mubr.f32.gmra.mxu0 %v489
        %v557 = vpop.f32.mrf.mxu0
        %v558 = vadd.f32 0.0, %v557
        %v559 = vpop.f32.mrf.mxu0
        %560 = vdwg.mxu0
        %v561 = vmul.f32 %v558, 0.35355338
        %v562 = vld [vmem:[#allocation11] sm:$0xff]
        %v563 = vld [vmem:[#allocation11 + $0x8] sm:$0xff]
        %v564 = vld [vmem:[#allocation11 + $0x10] sm:$0xff]
        %v565 = vld [vmem:[#allocation11 + $0x18] sm:$0xff]
        %v567 = vsel %vm487, %v481, 0
        %569 = vmatprep.subr.mxu0 0.0
        %570 = vmatpush1.msra.mxu0 0.0
        %571 = vmatprep.subr.mxu0 0.0
        %572 = vmatpush1.msra.mxu0 0.0
        %573 = vmatprep.subr.mxu0 0.0
        %574 = vmatpush1.msra.mxu0 0.0
        %575 = vmatprep.subr.mxu0 0.0
        %576 = vmatpush1.msra.mxu0 0.0
        %577 = vmatprep.subr.mxu0 0.0
        %578 = vmatpush1.msra.mxu0 0.0
        %579 = vmatprep.subr.mxu0 0.0
        %580 = vmatpush1.msra.mxu0 0.0
        %581 = vmatprep.subr.mxu0 0.0
        %582 = vmatpush1.msra.mxu0 0.0
        %583 = vmatprep.subr.mxu0 0.0
        %584 = vmatpush1.msra.mxu0 0.0
        %585 = vmatprep.subr.mxu0 0.0
        %586 = vmatpush1.msra.mxu0 0.0
        %587 = vmatprep.subr.mxu0 0.0
        %588 = vmatpush1.msra.mxu0 0.0
        %589 = vmatprep.subr.mxu0 0.0
        %590 = vmatpush1.msra.mxu0 0.0
        %591 = vmatprep.subr.mxu0 0.0
        %592 = vmatpush1.msra.mxu0 0.0
        %593 = vmatprep.subr.mxu0 0.0
        %594 = vmatpush1.msra.mxu0 %v565
        %595 = vmatprep.subr.mxu0 0.0
        %596 = vmatpush1.msra.mxu0 %v564
        %597 = vmatprep.subr.mxu0 0.0
        %598 = vmatpush1.msra.mxu0 %v563
        %599 = vmatprep.subr.mxu0 0.0
        %600 = vmatpush1.msra.mxu0 %v562
        %601 = vmatprep.subr.mxu0 0.0
        %602 = vmatpush2.msra.mxu0 0.0
        %603 = vmatprep.subr.mxu0 0.0
        %604 = vmatpush2.msra.mxu0 0.0
        %605 = vmatprep.subr.mxu0 0.0
        %606 = vmatpush2.msra.mxu0 0.0
        %607 = vmatprep.subr.mxu0 0.0
        %608 = vmatpush2.msra.mxu0 0.0
        %609 = vmatprep.subr.mxu0 0.0
        %610 = vmatpush2.msra.mxu0 0.0
        %611 = vmatprep.subr.mxu0 0.0
        %612 = vmatpush2.msra.mxu0 0.0
        %613 = vmatprep.subr.mxu0 0.0
        %614 = vmatpush2.msra.mxu0 0.0
        %615 = vmatprep.subr.mxu0 0.0
        %616 = vmatpush2.msra.mxu0 0.0
        %617 = vmatprep.subr.mxu0 0.0
        %618 = vmatpush2.msra.mxu0 0.0
        %619 = vmatprep.subr.mxu0 0.0
        %620 = vmatpush2.msra.mxu0 0.0
        %621 = vmatprep.subr.mxu0 0.0
        %622 = vmatpush2.msra.mxu0 0.0
        %623 = vmatprep.subr.mxu0 0.0
        %624 = vmatpush2.msra.mxu0 0.0
        %625 = vmatprep.subr.mxu0 0.0
        %626 = vmatpush2.msra.mxu0 0.0
        %627 = vmatprep.subr.mxu0 0.0
        %628 = vmatpush2.msra.mxu0 0.0
        %629 = vmatprep.subr.mxu0 0.0
        %630 = vmatpush2.msra.mxu0 0.0
        %631 = vmatprep.subr.mxu0 0.0
        %632 = vmatpush2.msra.mxu0 0.0
        %633 = vmatprep.mubr.f32.mxu0 0.0
        %634 = vmatmul.mubr.f32.gmra.mxu0 %v567
        %v635 = vpop.f32.mrf.mxu0
        %v636 = vadd.f32 0.0, %v635
        %v637 = vpop.f32.mrf.mxu0
        %638 = vdwg.mxu0
        %v639 = vld [vmem:[#allocation12] sm:$0xff]
        %v640 = vld [vmem:[#allocation12 + $0x8] sm:$0xff]
        %v641 = vld [vmem:[#allocation12 + $0x10] sm:$0xff]
        %v642 = vld [vmem:[#allocation12 + $0x18] sm:$0xff]
        %v644 = vsel %vm487, %v482, 0
        %646 = vmatprep.subr.mxu0 0.0
        %647 = vmatpush1.msra.mxu0 0.0
        %648 = vmatprep.subr.mxu0 0.0
        %649 = vmatpush1.msra.mxu0 0.0
        %650 = vmatprep.subr.mxu0 0.0
        %651 = vmatpush1.msra.mxu0 0.0
        %652 = vmatprep.subr.mxu0 0.0
        %653 = vmatpush1.msra.mxu0 0.0
        %654 = vmatprep.subr.mxu0 0.0
        %655 = vmatpush1.msra.mxu0 0.0
        %656 = vmatprep.subr.mxu0 0.0
        %657 = vmatpush1.msra.mxu0 0.0
        %658 = vmatprep.subr.mxu0 0.0
        %659 = vmatpush1.msra.mxu0 0.0
        %660 = vmatprep.subr.mxu0 0.0
        %661 = vmatpush1.msra.mxu0 0.0
        %662 = vmatprep.subr.mxu0 0.0
        %663 = vmatpush1.msra.mxu0 0.0
        %664 = vmatprep.subr.mxu0 0.0
        %665 = vmatpush1.msra.mxu0 0.0
        %666 = vmatprep.subr.mxu0 0.0
        %667 = vmatpush1.msra.mxu0 0.0
        %668 = vmatprep.subr.mxu0 0.0
        %669 = vmatpush1.msra.mxu0 0.0
        %670 = vmatprep.subr.mxu0 0.0
        %671 = vmatpush1.msra.mxu0 %v642
        %672 = vmatprep.subr.mxu0 0.0
        %673 = vmatpush1.msra.mxu0 %v641
        %674 = vmatprep.subr.mxu0 0.0
        %675 = vmatpush1.msra.mxu0 %v640
        %676 = vmatprep.subr.mxu0 0.0
        %677 = vmatpush1.msra.mxu0 %v639
        %678 = vmatprep.subr.mxu0 0.0
        %679 = vmatpush2.msra.mxu0 0.0
        %680 = vmatprep.subr.mxu0 0.0
        %681 = vmatpush2.msra.mxu0 0.0
        %682 = vmatprep.subr.mxu0 0.0
        %683 = vmatpush2.msra.mxu0 0.0
        %684 = vmatprep.subr.mxu0 0.0
        %685 = vmatpush2.msra.mxu0 0.0
        %686 = vmatprep.subr.mxu0 0.0
        %687 = vmatpush2.msra.mxu0 0.0
        %688 = vmatprep.subr.mxu0 0.0
        %689 = vmatpush2.msra.mxu0 0.0
        %690 = vmatprep.subr.mxu0 0.0
        %691 = vmatpush2.msra.mxu0 0.0
        %692 = vmatprep.subr.mxu0 0.0
        %693 = vmatpush2.msra.mxu0 0.0
        %694 = vmatprep.subr.mxu0 0.0
        %695 = vmatpush2.msra.mxu0 0.0
        %696 = vmatprep.subr.mxu0 0.0
        %697 = vmatpush2.msra.mxu0 0.0
        %698 = vmatprep.subr.mxu0 0.0
        %699 = vmatpush2.msra.mxu0 0.0
        %700 = vmatprep.subr.mxu0 0.0
        %701 = vmatpush2.msra.mxu0 0.0
        %702 = vmatprep.subr.mxu0 0.0
        %703 = vmatpush2.msra.mxu0 0.0
        %704 = vmatprep.subr.mxu0 0.0
        %705 = vmatpush2.msra.mxu0 0.0
        %706 = vmatprep.subr.mxu0 0.0
        %707 = vmatpush2.msra.mxu0 0.0
        %708 = vmatprep.subr.mxu0 0.0
        %709 = vmatpush2.msra.mxu0 0.0
        %710 = vmatprep.mubr.f32.mxu0 0.0
        %711 = vmatmul.mubr.f32.gmra.mxu0 %v644
        %v712 = vpop.f32.mrf.mxu0
        %v713 = vadd.f32 0.0, %v712
        %v714 = vpop.f32.mrf.mxu0
        %715 = vdwg.mxu0
        %vm716 = vcmask 64512
        %v718 = vsel %vm716, %v561, 0
        %v721 = vsel %vm716, %v636, 0
        %723 = vmatprep.subr.mxu0 0.0
        %724 = vmatpush1.xpose.msra.mxu0 0.0
        %725 = vmatprep.subr.mxu0 0.0
        %726 = vmatpush1.xpose.msra.mxu0 0.0
        %727 = vmatprep.subr.mxu0 0.0
        %728 = vmatpush1.xpose.msra.mxu0 0.0
        %729 = vmatprep.subr.mxu0 0.0
        %730 = vmatpush1.xpose.msra.mxu0 0.0
        %731 = vmatprep.subr.mxu0 0.0
        %732 = vmatpush1.xpose.msra.mxu0 0.0
        %733 = vmatprep.subr.mxu0 0.0
        %734 = vmatpush1.xpose.msra.mxu0 0.0
        %735 = vmatprep.subr.mxu0 0.0
        %736 = vmatpush1.xpose.msra.mxu0 0.0
        %737 = vmatprep.subr.mxu0 0.0
        %738 = vmatpush1.xpose.msra.mxu0 0.0
        %739 = vmatprep.subr.mxu0 0.0
        %740 = vmatpush1.xpose.msra.mxu0 0.0
        %741 = vmatprep.subr.mxu0 0.0
        %742 = vmatpush1.xpose.msra.mxu0 0.0
        %743 = vmatprep.subr.mxu0 0.0
        %744 = vmatpush1.xpose.msra.mxu0 0.0
        %745 = vmatprep.subr.mxu0 0.0
        %746 = vmatpush1.xpose.msra.mxu0 0.0
        %747 = vmatprep.subr.mxu0 0.0
        %748 = vmatpush1.xpose.msra.mxu0 0.0
        %749 = vmatprep.subr.mxu0 0.0
        %750 = vmatpush1.xpose.msra.mxu0 0.0
        %751 = vmatprep.subr.mxu0 0.0
        %752 = vmatpush1.xpose.msra.mxu0 0.0
        %753 = vmatprep.subr.mxu0 0.0
        %754 = vmatpush1.xpose.msra.mxu0 %v721
        %755 = vmatprep.subr.mxu0 0.0
        %756 = vmatpush2.xpose.msra.mxu0 0.0
        %757 = vmatprep.subr.mxu0 0.0
        %758 = vmatpush2.xpose.msra.mxu0 0.0
        %759 = vmatprep.subr.mxu0 0.0
        %760 = vmatpush2.xpose.msra.mxu0 0.0
        %761 = vmatprep.subr.mxu0 0.0
        %762 = vmatpush2.xpose.msra.mxu0 0.0
        %763 = vmatprep.subr.mxu0 0.0
        %764 = vmatpush2.xpose.msra.mxu0 0.0
        %765 = vmatprep.subr.mxu0 0.0
        %766 = vmatpush2.xpose.msra.mxu0 0.0
        %767 = vmatprep.subr.mxu0 0.0
        %768 = vmatpush2.xpose.msra.mxu0 0.0
        %769 = vmatprep.subr.mxu0 0.0
        %770 = vmatpush2.xpose.msra.mxu0 0.0
        %771 = vmatprep.subr.mxu0 0.0
        %772 = vmatpush2.xpose.msra.mxu0 0.0
        %773 = vmatprep.subr.mxu0 0.0
        %774 = vmatpush2.xpose.msra.mxu0 0.0
        %775 = vmatprep.subr.mxu0 0.0
        %776 = vmatpush2.xpose.msra.mxu0 0.0
        %777 = vmatprep.subr.mxu0 0.0
        %778 = vmatpush2.xpose.msra.mxu0 0.0
        %779 = vmatprep.subr.mxu0 0.0
        %780 = vmatpush2.xpose.msra.mxu0 0.0
        %781 = vmatprep.subr.mxu0 0.0
        %782 = vmatpush2.xpose.msra.mxu0 0.0
        %783 = vmatprep.subr.mxu0 0.0
        %784 = vmatpush2.xpose.msra.mxu0 0.0
        %785 = vmatprep.subr.mxu0 0.0
        %786 = vmatpush2.xpose.msra.mxu0 0.0
        %787 = vmatprep.mubr.f32.mxu0 0.0
        %788 = vmatmul.mubr.f32.gmra.mxu0 %v718
        %v789 = vpop.f32.mrf.mxu0
        %v790 = vadd.f32 0.0, %v789
        %v791 = vpop.f32.mrf.mxu0
        %792 = vdwg.mxu0
        %v793 = vsel %vm716, %v790, -inf
        %794 = vmax.xlane.f32.xlu0 %v793
        %v795 = vpop.xlane.xlu0 %794
        %v796 = vsub.f32 %v790, %v795
        %v797 = vmul.f32 %v796, 1.442695
        %v798 = vpow.pop %v797
        %v799 = vsel %vm716, %v798, 0.0
        %800 = vadd.xlane.f32.xlu0 %v799
        %v801 = vpop.xlane.xlu0 %800
        %v802 = vrcp.pop %v801
        %v803 = vmul.f32 %v798, %v802
        %804 = vst.msk [vmem:[%s479] sm:$0xff] %vm716, %v803
        %v806 = vsel %vm716, %v803, 0
        %808 = vmatprep.subr.mxu0 0.0
        %809 = vmatpush1.msra.mxu0 0.0
        %810 = vmatprep.subr.mxu0 0.0
        %811 = vmatpush1.msra.mxu0 0.0
        %812 = vmatprep.subr.mxu0 0.0
        %813 = vmatpush1.msra.mxu0 0.0
        %814 = vmatprep.subr.mxu0 0.0
        %815 = vmatpush1.msra.mxu0 0.0
        %816 = vmatprep.subr.mxu0 0.0
        %817 = vmatpush1.msra.mxu0 0.0
        %818 = vmatprep.subr.mxu0 0.0
        %819 = vmatpush1.msra.mxu0 0.0
        %820 = vmatprep.subr.mxu0 0.0
        %821 = vmatpush1.msra.mxu0 0.0
        %822 = vmatprep.subr.mxu0 0.0
        %823 = vmatpush1.msra.mxu0 0.0
        %824 = vmatprep.subr.mxu0 0.0
        %825 = vmatpush1.msra.mxu0 0.0
        %826 = vmatprep.subr.mxu0 0.0
        %827 = vmatpush1.msra.mxu0 0.0
        %828 = vmatprep.subr.mxu0 0.0
        %829 = vmatpush1.msra.mxu0 0.0
        %830 = vmatprep.subr.mxu0 0.0
        %831 = vmatpush1.msra.mxu0 0.0
        %832 = vmatprep.subr.mxu0 0.0
        %833 = vmatpush1.msra.mxu0 0.0
        %834 = vmatprep.subr.mxu0 0.0
        %835 = vmatpush1.msra.mxu0 0.0
        %836 = vmatprep.subr.mxu0 0.0
        %837 = vmatpush1.msra.mxu0 0.0
        %838 = vmatprep.subr.mxu0 0.0
        %839 = vmatpush1.msra.mxu0 %v713
        %840 = vmatprep.subr.mxu0 0.0
        %841 = vmatpush2.msra.mxu0 0.0
        %842 = vmatprep.subr.mxu0 0.0
        %843 = vmatpush2.msra.mxu0 0.0
        %844 = vmatprep.subr.mxu0 0.0
        %845 = vmatpush2.msra.mxu0 0.0
        %846 = vmatprep.subr.mxu0 0.0
        %847 = vmatpush2.msra.mxu0 0.0
        %848 = vmatprep.subr.mxu0 0.0
        %849 = vmatpush2.msra.mxu0 0.0
        %850 = vmatprep.subr.mxu0 0.0
        %851 = vmatpush2.msra.mxu0 0.0
        %852 = vmatprep.subr.mxu0 0.0
        %853 = vmatpush2.msra.mxu0 0.0
        %854 = vmatprep.subr.mxu0 0.0
        %855 = vmatpush2.msra.mxu0 0.0
        %856 = vmatprep.subr.mxu0 0.0
        %857 = vmatpush2.msra.mxu0 0.0
        %858 = vmatprep.subr.mxu0 0.0
        %859 = vmatpush2.msra.mxu0 0.0
        %860 = vmatprep.subr.mxu0 0.0
        %861 = vmatpush2.msra.mxu0 0.0
        %862 = vmatprep.subr.mxu0 0.0
        %863 = vmatpush2.msra.mxu0 0.0
        %864 = vmatprep.subr.mxu0 0.0
        %865 = vmatpush2.msra.mxu0 0.0
        %866 = vmatprep.subr.mxu0 0.0
        %867 = vmatpush2.msra.mxu0 0.0
        %868 = vmatprep.subr.mxu0 0.0
        %869 = vmatpush2.msra.mxu0 0.0
        %870 = vmatprep.subr.mxu0 0.0
        %871 = vmatpush2.msra.mxu0 0.0
        %872 = vmatprep.mubr.f32.mxu0 0.0
        %873 = vmatmul.mubr.f32.gmra.mxu0 %v806
        %v874 = vpop.f32.mrf.mxu0
        %v875 = vadd.f32 0.0, %v874
        %v876 = vpop.f32.mrf.mxu0
        %877 = vdwg.mxu0
        %878 = vst.msk [vmem:[#allocation2] sm:$0xff] %vm716, %v875
        %879 = vrot.lane.b32.xlu0 %v561, 120
        %v880 = vpop.permute.xlu0 %879
        %881 = vrot.lane.b32.xlu0 %v636, 120
        %v882 = vpop.permute.xlu0 %881
        %v883 = vsel %vm716, %v880, 0
        %v885 = vsel %vm716, %v882, 0
        %887 = vmatprep.subr.mxu0 0.0
        %888 = vmatpush1.xpose.msra.mxu0 0.0
        %889 = vmatprep.subr.mxu0 0.0
        %890 = vmatpush1.xpose.msra.mxu0 0.0
        %891 = vmatprep.subr.mxu0 0.0
        %892 = vmatpush1.xpose.msra.mxu0 0.0
        %893 = vmatprep.subr.mxu0 0.0
        %894 = vmatpush1.xpose.msra.mxu0 0.0
        %895 = vmatprep.subr.mxu0 0.0
        %896 = vmatpush1.xpose.msra.mxu0 0.0
        %897 = vmatprep.subr.mxu0 0.0
        %898 = vmatpush1.xpose.msra.mxu0 0.0
        %899 = vmatprep.subr.mxu0 0.0
        %900 = vmatpush1.xpose.msra.mxu0 0.0
        %901 = vmatprep.subr.mxu0 0.0
        %902 = vmatpush1.xpose.msra.mxu0 0.0
        %903 = vmatprep.subr.mxu0 0.0
        %904 = vmatpush1.xpose.msra.mxu0 0.0
        %905 = vmatprep.subr.mxu0 0.0
        %906 = vmatpush1.xpose.msra.mxu0 0.0
        %907 = vmatprep.subr.mxu0 0.0
        %908 = vmatpush1.xpose.msra.mxu0 0.0
        %909 = vmatprep.subr.mxu0 0.0
        %910 = vmatpush1.xpose.msra.mxu0 0.0
        %911 = vmatprep.subr.mxu0 0.0
        %912 = vmatpush1.xpose.msra.mxu0 0.0
        %913 = vmatprep.subr.mxu0 0.0
        %914 = vmatpush1.xpose.msra.mxu0 0.0
        %915 = vmatprep.subr.mxu0 0.0
        %916 = vmatpush1.xpose.msra.mxu0 0.0
        %917 = vmatprep.subr.mxu0 0.0
        %918 = vmatpush1.xpose.msra.mxu0 %v885
        %919 = vmatprep.subr.mxu0 0.0
        %920 = vmatpush2.xpose.msra.mxu0 0.0
        %921 = vmatprep.subr.mxu0 0.0
        %922 = vmatpush2.xpose.msra.mxu0 0.0
        %923 = vmatprep.subr.mxu0 0.0
        %924 = vmatpush2.xpose.msra.mxu0 0.0
        %925 = vmatprep.subr.mxu0 0.0
        %926 = vmatpush2.xpose.msra.mxu0 0.0
        %927 = vmatprep.subr.mxu0 0.0
        %928 = vmatpush2.xpose.msra.mxu0 0.0
        %929 = vmatprep.subr.mxu0 0.0
        %930 = vmatpush2.xpose.msra.mxu0 0.0
        %931 = vmatprep.subr.mxu0 0.0
        %932 = vmatpush2.xpose.msra.mxu0 0.0
        %933 = vmatprep.subr.mxu0 0.0
        %934 = vmatpush2.xpose.msra.mxu0 0.0
        %935 = vmatprep.subr.mxu0 0.0
        %936 = vmatpush2.xpose.msra.mxu0 0.0
        %937 = vmatprep.subr.mxu0 0.0
        %938 = vmatpush2.xpose.msra.mxu0 0.0
        %939 = vmatprep.subr.mxu0 0.0
        %940 = vmatpush2.xpose.msra.mxu0 0.0
        %941 = vmatprep.subr.mxu0 0.0
        %942 = vmatpush2.xpose.msra.mxu0 0.0
        %943 = vmatprep.subr.mxu0 0.0
        %944 = vmatpush2.xpose.msra.mxu0 0.0
        %945 = vmatprep.subr.mxu0 0.0
        %946 = vmatpush2.xpose.msra.mxu0 0.0
        %947 = vmatprep.subr.mxu0 0.0
        %948 = vmatpush2.xpose.msra.mxu0 0.0
        %949 = vmatprep.subr.mxu0 0.0
        %950 = vmatpush2.xpose.msra.mxu0 0.0
        %951 = vmatprep.mubr.f32.mxu0 0.0
        %952 = vmatmul.mubr.f32.gmra.mxu0 %v883
        %v953 = vpop.f32.mrf.mxu0
        %v954 = vadd.f32 0.0, %v953
        %v955 = vpop.f32.mrf.mxu0
        %956 = vdwg.mxu0
        %v957 = vsel %vm716, %v954, -inf
        %958 = vmax.xlane.f32.xlu0 %v957
        %v959 = vpop.xlane.xlu0 %958
        %v960 = vsub.f32 %v954, %v959
        %v961 = vmul.f32 %v960, 1.442695
        %v962 = vpow.pop %v961
        %v963 = vsel %vm716, %v962, 0.0
        %964 = vadd.xlane.f32.xlu0 %v963
        %v965 = vpop.xlane.xlu0 %964
        %v966 = vrcp.pop %v965
        %v967 = vmul.f32 %v962, %v966
        %s968 = scalar_lea.vmem %s479, 8 [#allocation16]
        %969 = vst.msk [vmem:[%s968] sm:$0xff] %vm716, %v967
        %971 = vrot.lane.b32.xlu0 %v713, 120
        %v972 = vpop.permute.xlu0 %971
        %v975 = vsel %vm716, %v967, 0
        %977 = vmatprep.subr.mxu0 0.0
        %978 = vmatpush1.msra.mxu0 0.0
        %979 = vmatprep.subr.mxu0 0.0
        %980 = vmatpush1.msra.mxu0 0.0
        %981 = vmatprep.subr.mxu0 0.0
        %982 = vmatpush1.msra.mxu0 0.0
        %983 = vmatprep.subr.mxu0 0.0
        %984 = vmatpush1.msra.mxu0 0.0
        %985 = vmatprep.subr.mxu0 0.0
        %986 = vmatpush1.msra.mxu0 0.0
        %987 = vmatprep.subr.mxu0 0.0
        %988 = vmatpush1.msra.mxu0 0.0
        %989 = vmatprep.subr.mxu0 0.0
        %990 = vmatpush1.msra.mxu0 0.0
        %991 = vmatprep.subr.mxu0 0.0
        %992 = vmatpush1.msra.mxu0 0.0
        %993 = vmatprep.subr.mxu0 0.0
        %994 = vmatpush1.msra.mxu0 0.0
        %995 = vmatprep.subr.mxu0 0.0
        %996 = vmatpush1.msra.mxu0 0.0
        %997 = vmatprep.subr.mxu0 0.0
        %998 = vmatpush1.msra.mxu0 0.0
        %999 = vmatprep.subr.mxu0 0.0
        %1000 = vmatpush1.msra.mxu0 0.0
        %1001 = vmatprep.subr.mxu0 0.0
        %1002 = vmatpush1.msra.mxu0 0.0
        %1003 = vmatprep.subr.mxu0 0.0
        %1004 = vmatpush1.msra.mxu0 0.0
        %1005 = vmatprep.subr.mxu0 0.0
        %1006 = vmatpush1.msra.mxu0 0.0
        %1007 = vmatprep.subr.mxu0 0.0
        %1008 = vmatpush1.msra.mxu0 %v972
        %1009 = vmatprep.subr.mxu0 0.0
        %1010 = vmatpush2.msra.mxu0 0.0
        %1011 = vmatprep.subr.mxu0 0.0
        %1012 = vmatpush2.msra.mxu0 0.0
        %1013 = vmatprep.subr.mxu0 0.0
        %1014 = vmatpush2.msra.mxu0 0.0
        %1015 = vmatprep.subr.mxu0 0.0
        %1016 = vmatpush2.msra.mxu0 0.0
        %1017 = vmatprep.subr.mxu0 0.0
        %1018 = vmatpush2.msra.mxu0 0.0
        %1019 = vmatprep.subr.mxu0 0.0
        %1020 = vmatpush2.msra.mxu0 0.0
        %1021 = vmatprep.subr.mxu0 0.0
        %1022 = vmatpush2.msra.mxu0 0.0
        %1023 = vmatprep.subr.mxu0 0.0
        %1024 = vmatpush2.msra.mxu0 0.0
        %1025 = vmatprep.subr.mxu0 0.0
        %1026 = vmatpush2.msra.mxu0 0.0
        %1027 = vmatprep.subr.mxu0 0.0
        %1028 = vmatpush2.msra.mxu0 0.0
        %1029 = vmatprep.subr.mxu0 0.0
        %1030 = vmatpush2.msra.mxu0 0.0
        %1031 = vmatprep.subr.mxu0 0.0
        %1032 = vmatpush2.msra.mxu0 0.0
        %1033 = vmatprep.subr.mxu0 0.0
        %1034 = vmatpush2.msra.mxu0 0.0
        %1035 = vmatprep.subr.mxu0 0.0
        %1036 = vmatpush2.msra.mxu0 0.0
        %1037 = vmatprep.subr.mxu0 0.0
        %1038 = vmatpush2.msra.mxu0 0.0
        %1039 = vmatprep.subr.mxu0 0.0
        %1040 = vmatpush2.msra.mxu0 0.0
        %1041 = vmatprep.mubr.f32.mxu0 0.0
        %1042 = vmatmul.mubr.f32.gmra.mxu0 %v975
        %v1043 = vpop.f32.mrf.mxu0
        %v1044 = vadd.f32 0.0, %v1043
        %v1045 = vpop.f32.mrf.mxu0
        %1046 = vdwg.mxu0
        %1048 = vrot.lane.b32.xlu0 %v1044, 8
        %v1049 = vpop.permute.xlu0 %1048
        %vm1051 = vcmask 130112
        %1052 = vst.msk [vmem:[#allocation2] sm:$0xff] %vm1051, %v1049
        %1053 = vrot.lane.b32.xlu0 %v561, 112
        %v1054 = vpop.permute.xlu0 %1053
        %1055 = vrot.lane.b32.xlu0 %v636, 112
        %v1056 = vpop.permute.xlu0 %1055
        %v1057 = vsel %vm716, %v1054, 0
        %v1059 = vsel %vm716, %v1056, 0
        %1061 = vmatprep.subr.mxu0 0.0
        %1062 = vmatpush1.xpose.msra.mxu0 0.0
        %1063 = vmatprep.subr.mxu0 0.0
        %1064 = vmatpush1.xpose.msra.mxu0 0.0
        %1065 = vmatprep.subr.mxu0 0.0
        %1066 = vmatpush1.xpose.msra.mxu0 0.0
        %1067 = vmatprep.subr.mxu0 0.0
        %1068 = vmatpush1.xpose.msra.mxu0 0.0
        %1069 = vmatprep.subr.mxu0 0.0
        %1070 = vmatpush1.xpose.msra.mxu0 0.0
        %1071 = vmatprep.subr.mxu0 0.0
        %1072 = vmatpush1.xpose.msra.mxu0 0.0
        %1073 = vmatprep.subr.mxu0 0.0
        %1074 = vmatpush1.xpose.msra.mxu0 0.0
        %1075 = vmatprep.subr.mxu0 0.0
        %1076 = vmatpush1.xpose.msra.mxu0 0.0
        %1077 = vmatprep.subr.mxu0 0.0
        %1078 = vmatpush1.xpose.msra.mxu0 0.0
        %1079 = vmatprep.subr.mxu0 0.0
        %1080 = vmatpush1.xpose.msra.mxu0 0.0
        %1081 = vmatprep.subr.mxu0 0.0
        %1082 = vmatpush1.xpose.msra.mxu0 0.0
        %1083 = vmatprep.subr.mxu0 0.0
        %1084 = vmatpush1.xpose.msra.mxu0 0.0
        %1085 = vmatprep.subr.mxu0 0.0
        %1086 = vmatpush1.xpose.msra.mxu0 0.0
        %1087 = vmatprep.subr.mxu0 0.0
        %1088 = vmatpush1.xpose.msra.mxu0 0.0
        %1089 = vmatprep.subr.mxu0 0.0
        %1090 = vmatpush1.xpose.msra.mxu0 0.0
        %1091 = vmatprep.subr.mxu0 0.0
        %1092 = vmatpush1.xpose.msra.mxu0 %v1059
        %1093 = vmatprep.subr.mxu0 0.0
        %1094 = vmatpush2.xpose.msra.mxu0 0.0
        %1095 = vmatprep.subr.mxu0 0.0
        %1096 = vmatpush2.xpose.msra.mxu0 0.0
        %1097 = vmatprep.subr.mxu0 0.0
        %1098 = vmatpush2.xpose.msra.mxu0 0.0
        %1099 = vmatprep.subr.mxu0 0.0
        %1100 = vmatpush2.xpose.msra.mxu0 0.0
        %1101 = vmatprep.subr.mxu0 0.0
        %1102 = vmatpush2.xpose.msra.mxu0 0.0
        %1103 = vmatprep.subr.mxu0 0.0
        %1104 = vmatpush2.xpose.msra.mxu0 0.0
        %1105 = vmatprep.subr.mxu0 0.0
        %1106 = vmatpush2.xpose.msra.mxu0 0.0
        %1107 = vmatprep.subr.mxu0 0.0
        %1108 = vmatpush2.xpose.msra.mxu0 0.0
        %1109 = vmatprep.subr.mxu0 0.0
        %1110 = vmatpush2.xpose.msra.mxu0 0.0
        %1111 = vmatprep.subr.mxu0 0.0
        %1112 = vmatpush2.xpose.msra.mxu0 0.0
        %1113 = vmatprep.subr.mxu0 0.0
        %1114 = vmatpush2.xpose.msra.mxu0 0.0
        %1115 = vmatprep.subr.mxu0 0.0
        %1116 = vmatpush2.xpose.msra.mxu0 0.0
        %1117 = vmatprep.subr.mxu0 0.0
        %1118 = vmatpush2.xpose.msra.mxu0 0.0
        %1119 = vmatprep.subr.mxu0 0.0
        %1120 = vmatpush2.xpose.msra.mxu0 0.0
        %1121 = vmatprep.subr.mxu0 0.0
        %1122 = vmatpush2.xpose.msra.mxu0 0.0
        %1123 = vmatprep.subr.mxu0 0.0
        %1124 = vmatpush2.xpose.msra.mxu0 0.0
        %1125 = vmatprep.mubr.f32.mxu0 0.0
        %1126 = vmatmul.mubr.f32.gmra.mxu0 %v1057
        %v1127 = vpop.f32.mrf.mxu0
        %v1128 = vadd.f32 0.0, %v1127
        %v1129 = vpop.f32.mrf.mxu0
        %1130 = vdwg.mxu0
        %v1131 = vsel %vm716, %v1128, -inf
        %1132 = vmax.xlane.f32.xlu0 %v1131
        %v1133 = vpop.xlane.xlu0 %1132
        %v1134 = vsub.f32 %v1128, %v1133
        %v1135 = vmul.f32 %v1134, 1.442695
        %v1136 = vpow.pop %v1135
        %v1137 = vsel %vm716, %v1136, 0.0
        %1138 = vadd.xlane.f32.xlu0 %v1137
        %v1139 = vpop.xlane.xlu0 %1138
        %v1140 = vrcp.pop %v1139
        %v1141 = vmul.f32 %v1136, %v1140
        %s1142 = scalar_lea.vmem %s479, 16 [#allocation16]
        %1143 = vst.msk [vmem:[%s1142] sm:$0xff] %vm716, %v1141
        %1144 = vrot.lane.b32.xlu0 %v713, 112
        %v1145 = vpop.permute.xlu0 %1144
        %v1148 = vsel %vm716, %v1141, 0
        %1150 = vmatprep.subr.mxu0 0.0
        %1151 = vmatpush1.msra.mxu0 0.0
        %1152 = vmatprep.subr.mxu0 0.0
        %1153 = vmatpush1.msra.mxu0 0.0
        %1154 = vmatprep.subr.mxu0 0.0
        %1155 = vmatpush1.msra.mxu0 0.0
        %1156 = vmatprep.subr.mxu0 0.0
        %1157 = vmatpush1.msra.mxu0 0.0
        %1158 = vmatprep.subr.mxu0 0.0
        %1159 = vmatpush1.msra.mxu0 0.0
        %1160 = vmatprep.subr.mxu0 0.0
        %1161 = vmatpush1.msra.mxu0 0.0
        %1162 = vmatprep.subr.mxu0 0.0
        %1163 = vmatpush1.msra.mxu0 0.0
        %1164 = vmatprep.subr.mxu0 0.0
        %1165 = vmatpush1.msra.mxu0 0.0
        %1166 = vmatprep.subr.mxu0 0.0
        %1167 = vmatpush1.msra.mxu0 0.0
        %1168 = vmatprep.subr.mxu0 0.0
        %1169 = vmatpush1.msra.mxu0 0.0
        %1170 = vmatprep.subr.mxu0 0.0
        %1171 = vmatpush1.msra.mxu0 0.0
        %1172 = vmatprep.subr.mxu0 0.0
        %1173 = vmatpush1.msra.mxu0 0.0
        %1174 = vmatprep.subr.mxu0 0.0
        %1175 = vmatpush1.msra.mxu0 0.0
        %1176 = vmatprep.subr.mxu0 0.0
        %1177 = vmatpush1.msra.mxu0 0.0
        %1178 = vmatprep.subr.mxu0 0.0
        %1179 = vmatpush1.msra.mxu0 0.0
        %1180 = vmatprep.subr.mxu0 0.0
        %1181 = vmatpush1.msra.mxu0 %v1145
        %1182 = vmatprep.subr.mxu0 0.0
        %1183 = vmatpush2.msra.mxu0 0.0
        %1184 = vmatprep.subr.mxu0 0.0
        %1185 = vmatpush2.msra.mxu0 0.0
        %1186 = vmatprep.subr.mxu0 0.0
        %1187 = vmatpush2.msra.mxu0 0.0
        %1188 = vmatprep.subr.mxu0 0.0
        %1189 = vmatpush2.msra.mxu0 0.0
        %1190 = vmatprep.subr.mxu0 0.0
        %1191 = vmatpush2.msra.mxu0 0.0
        %1192 = vmatprep.subr.mxu0 0.0
        %1193 = vmatpush2.msra.mxu0 0.0
        %1194 = vmatprep.subr.mxu0 0.0
        %1195 = vmatpush2.msra.mxu0 0.0
        %1196 = vmatprep.subr.mxu0 0.0
        %1197 = vmatpush2.msra.mxu0 0.0
        %1198 = vmatprep.subr.mxu0 0.0
        %1199 = vmatpush2.msra.mxu0 0.0
        %1200 = vmatprep.subr.mxu0 0.0
        %1201 = vmatpush2.msra.mxu0 0.0
        %1202 = vmatprep.subr.mxu0 0.0
        %1203 = vmatpush2.msra.mxu0 0.0
        %1204 = vmatprep.subr.mxu0 0.0
        %1205 = vmatpush2.msra.mxu0 0.0
        %1206 = vmatprep.subr.mxu0 0.0
        %1207 = vmatpush2.msra.mxu0 0.0
        %1208 = vmatprep.subr.mxu0 0.0
        %1209 = vmatpush2.msra.mxu0 0.0
        %1210 = vmatprep.subr.mxu0 0.0
        %1211 = vmatpush2.msra.mxu0 0.0
        %1212 = vmatprep.subr.mxu0 0.0
        %1213 = vmatpush2.msra.mxu0 0.0
        %1214 = vmatprep.mubr.f32.mxu0 0.0
        %1215 = vmatmul.mubr.f32.gmra.mxu0 %v1148
        %v1216 = vpop.f32.mrf.mxu0
        %v1217 = vadd.f32 0.0, %v1216
        %v1218 = vpop.f32.mrf.mxu0
        %1219 = vdwg.mxu0
        %1221 = vrot.lane.b32.xlu0 %v1217, 16
        %v1222 = vpop.permute.xlu0 %1221
        %vm1224 = vcmask 195712
        %1225 = vst.msk [vmem:[#allocation2] sm:$0xff] %vm1224, %v1222
        %1226 = vrot.lane.b32.xlu0 %v561, 104
        %v1227 = vpop.permute.xlu0 %1226
        %1228 = vrot.lane.b32.xlu0 %v636, 104
        %v1229 = vpop.permute.xlu0 %1228
        %v1230 = vsel %vm716, %v1227, 0
        %v1232 = vsel %vm716, %v1229, 0
        %1234 = vmatprep.subr.mxu0 0.0
        %1235 = vmatpush1.xpose.msra.mxu0 0.0
        %1236 = vmatprep.subr.mxu0 0.0
        %1237 = vmatpush1.xpose.msra.mxu0 0.0
        %1238 = vmatprep.subr.mxu0 0.0
        %1239 = vmatpush1.xpose.msra.mxu0 0.0
        %1240 = vmatprep.subr.mxu0 0.0
        %1241 = vmatpush1.xpose.msra.mxu0 0.0
        %1242 = vmatprep.subr.mxu0 0.0
        %1243 = vmatpush1.xpose.msra.mxu0 0.0
        %1244 = vmatprep.subr.mxu0 0.0
        %1245 = vmatpush1.xpose.msra.mxu0 0.0
        %1246 = vmatprep.subr.mxu0 0.0
        %1247 = vmatpush1.xpose.msra.mxu0 0.0
        %1248 = vmatprep.subr.mxu0 0.0
        %1249 = vmatpush1.xpose.msra.mxu0 0.0
        %1250 = vmatprep.subr.mxu0 0.0
        %1251 = vmatpush1.xpose.msra.mxu0 0.0
        %1252 = vmatprep.subr.mxu0 0.0
        %1253 = vmatpush1.xpose.msra.mxu0 0.0
        %1254 = vmatprep.subr.mxu0 0.0
        %1255 = vmatpush1.xpose.msra.mxu0 0.0
        %1256 = vmatprep.subr.mxu0 0.0
        %1257 = vmatpush1.xpose.msra.mxu0 0.0
        %1258 = vmatprep.subr.mxu0 0.0
        %1259 = vmatpush1.xpose.msra.mxu0 0.0
        %1260 = vmatprep.subr.mxu0 0.0
        %1261 = vmatpush1.xpose.msra.mxu0 0.0
        %1262 = vmatprep.subr.mxu0 0.0
        %1263 = vmatpush1.xpose.msra.mxu0 0.0
        %1264 = vmatprep.subr.mxu0 0.0
        %1265 = vmatpush1.xpose.msra.mxu0 %v1232
        %1266 = vmatprep.subr.mxu0 0.0
        %1267 = vmatpush2.xpose.msra.mxu0 0.0
        %1268 = vmatprep.subr.mxu0 0.0
        %1269 = vmatpush2.xpose.msra.mxu0 0.0
        %1270 = vmatprep.subr.mxu0 0.0
        %1271 = vmatpush2.xpose.msra.mxu0 0.0
        %1272 = vmatprep.subr.mxu0 0.0
        %1273 = vmatpush2.xpose.msra.mxu0 0.0
        %1274 = vmatprep.subr.mxu0 0.0
        %1275 = vmatpush2.xpose.msra.mxu0 0.0
        %1276 = vmatprep.subr.mxu0 0.0
        %1277 = vmatpush2.xpose.msra.mxu0 0.0
        %1278 = vmatprep.subr.mxu0 0.0
        %1279 = vmatpush2.xpose.msra.mxu0 0.0
        %1280 = vmatprep.subr.mxu0 0.0
        %1281 = vmatpush2.xpose.msra.mxu0 0.0
        %1282 = vmatprep.subr.mxu0 0.0
        %1283 = vmatpush2.xpose.msra.mxu0 0.0
        %1284 = vmatprep.subr.mxu0 0.0
        %1285 = vmatpush2.xpose.msra.mxu0 0.0
        %1286 = vmatprep.subr.mxu0 0.0
        %1287 = vmatpush2.xpose.msra.mxu0 0.0
        %1288 = vmatprep.subr.mxu0 0.0
        %1289 = vmatpush2.xpose.msra.mxu0 0.0
        %1290 = vmatprep.subr.mxu0 0.0
        %1291 = vmatpush2.xpose.msra.mxu0 0.0
        %1292 = vmatprep.subr.mxu0 0.0
        %1293 = vmatpush2.xpose.msra.mxu0 0.0
        %1294 = vmatprep.subr.mxu0 0.0
        %1295 = vmatpush2.xpose.msra.mxu0 0.0
        %1296 = vmatprep.subr.mxu0 0.0
        %1297 = vmatpush2.xpose.msra.mxu0 0.0
        %1298 = vmatprep.mubr.f32.mxu0 0.0
        %1299 = vmatmul.mubr.f32.gmra.mxu0 %v1230
        %v1300 = vpop.f32.mrf.mxu0
        %v1301 = vadd.f32 0.0, %v1300
        %v1302 = vpop.f32.mrf.mxu0
        %1303 = vdwg.mxu0
        %v1304 = vsel %vm716, %v1301, -inf
        %1305 = vmax.xlane.f32.xlu0 %v1304
        %v1306 = vpop.xlane.xlu0 %1305
        %v1307 = vsub.f32 %v1301, %v1306
        %v1308 = vmul.f32 %v1307, 1.442695
        %v1309 = vpow.pop %v1308
        %v1310 = vsel %vm716, %v1309, 0.0
        %1311 = vadd.xlane.f32.xlu0 %v1310
        %v1312 = vpop.xlane.xlu0 %1311
        %v1313 = vrcp.pop %v1312
        %v1314 = vmul.f32 %v1309, %v1313
        %s1315 = scalar_lea.vmem %s479, 24 [#allocation16]
        %1316 = vst.msk [vmem:[%s1315] sm:$0xff] %vm716, %v1314
        %1317 = vrot.lane.b32.xlu0 %v713, 104
        %v1318 = vpop.permute.xlu0 %1317
        %v1321 = vsel %vm716, %v1314, 0
        %1323 = vmatprep.subr.mxu0 0.0
        %1324 = vmatpush1.msra.mxu0 0.0
        %1325 = vmatprep.subr.mxu0 0.0
        %1326 = vmatpush1.msra.mxu0 0.0
        %1327 = vmatprep.subr.mxu0 0.0
        %1328 = vmatpush1.msra.mxu0 0.0
        %1329 = vmatprep.subr.mxu0 0.0
        %1330 = vmatpush1.msra.mxu0 0.0
        %1331 = vmatprep.subr.mxu0 0.0
        %1332 = vmatpush1.msra.mxu0 0.0
        %1333 = vmatprep.subr.mxu0 0.0
        %1334 = vmatpush1.msra.mxu0 0.0
        %1335 = vmatprep.subr.mxu0 0.0
        %1336 = vmatpush1.msra.mxu0 0.0
        %1337 = vmatprep.subr.mxu0 0.0
        %1338 = vmatpush1.msra.mxu0 0.0
        %1339 = vmatprep.subr.mxu0 0.0
        %1340 = vmatpush1.msra.mxu0 0.0
        %1341 = vmatprep.subr.mxu0 0.0
        %1342 = vmatpush1.msra.mxu0 0.0
        %1343 = vmatprep.subr.mxu0 0.0
        %1344 = vmatpush1.msra.mxu0 0.0
        %1345 = vmatprep.subr.mxu0 0.0
        %1346 = vmatpush1.msra.mxu0 0.0
        %1347 = vmatprep.subr.mxu0 0.0
        %1348 = vmatpush1.msra.mxu0 0.0
        %1349 = vmatprep.subr.mxu0 0.0
        %1350 = vmatpush1.msra.mxu0 0.0
        %1351 = vmatprep.subr.mxu0 0.0
        %1352 = vmatpush1.msra.mxu0 0.0
        %1353 = vmatprep.subr.mxu0 0.0
        %1354 = vmatpush1.msra.mxu0 %v1318
        %1355 = vmatprep.subr.mxu0 0.0
        %1356 = vmatpush2.msra.mxu0 0.0
        %1357 = vmatprep.subr.mxu0 0.0
        %1358 = vmatpush2.msra.mxu0 0.0
        %1359 = vmatprep.subr.mxu0 0.0
        %1360 = vmatpush2.msra.mxu0 0.0
        %1361 = vmatprep.subr.mxu0 0.0
        %1362 = vmatpush2.msra.mxu0 0.0
        %1363 = vmatprep.subr.mxu0 0.0
        %1364 = vmatpush2.msra.mxu0 0.0
        %1365 = vmatprep.subr.mxu0 0.0
        %1366 = vmatpush2.msra.mxu0 0.0
        %1367 = vmatprep.subr.mxu0 0.0
        %1368 = vmatpush2.msra.mxu0 0.0
        %1369 = vmatprep.subr.mxu0 0.0
        %1370 = vmatpush2.msra.mxu0 0.0
        %1371 = vmatprep.subr.mxu0 0.0
        %1372 = vmatpush2.msra.mxu0 0.0
        %1373 = vmatprep.subr.mxu0 0.0
        %1374 = vmatpush2.msra.mxu0 0.0
        %1375 = vmatprep.subr.mxu0 0.0
        %1376 = vmatpush2.msra.mxu0 0.0
        %1377 = vmatprep.subr.mxu0 0.0
        %1378 = vmatpush2.msra.mxu0 0.0
        %1379 = vmatprep.subr.mxu0 0.0
        %1380 = vmatpush2.msra.mxu0 0.0
        %1381 = vmatprep.subr.mxu0 0.0
        %1382 = vmatpush2.msra.mxu0 0.0
        %1383 = vmatprep.subr.mxu0 0.0
        %1384 = vmatpush2.msra.mxu0 0.0
        %1385 = vmatprep.subr.mxu0 0.0
        %1386 = vmatpush2.msra.mxu0 0.0
        %1387 = vmatprep.mubr.f32.mxu0 0.0
        %1388 = vmatmul.mubr.f32.gmra.mxu0 %v1321
        %v1389 = vpop.f32.mrf.mxu0
        %v1390 = vadd.f32 0.0, %v1389
        %v1391 = vpop.f32.mrf.mxu0
        %1392 = vdwg.mxu0
        %1394 = vrot.lane.b32.xlu0 %v1390, 24
        %v1395 = vpop.permute.xlu0 %1394
        %vm1397 = vcmask 261312
        %1398 = vst.msk [vmem:[#allocation2] sm:$0xff] %vm1397, %v1395
        %v1399 = vld [vmem:[#allocation2] sm:$0xff]
        %v1400 = vld [vmem:[#allocation14] sm:$0xff]
        %v1401 = vld [vmem:[#allocation14 + $0x8] sm:$0xff]
        %v1402 = vld [vmem:[#allocation14 + $0x10] sm:$0xff]
        %v1403 = vld [vmem:[#allocation14 + $0x18] sm:$0xff]
        %v1405 = vsel %vm487, %v1399, 0
        %1407 = vmatprep.subr.mxu0 0.0
        %1408 = vmatpush1.msra.mxu0 0.0
        %1409 = vmatprep.subr.mxu0 0.0
        %1410 = vmatpush1.msra.mxu0 0.0
        %1411 = vmatprep.subr.mxu0 0.0
        %1412 = vmatpush1.msra.mxu0 0.0
        %1413 = vmatprep.subr.mxu0 0.0
        %1414 = vmatpush1.msra.mxu0 0.0
        %1415 = vmatprep.subr.mxu0 0.0
        %1416 = vmatpush1.msra.mxu0 0.0
        %1417 = vmatprep.subr.mxu0 0.0
        %1418 = vmatpush1.msra.mxu0 0.0
        %1419 = vmatprep.subr.mxu0 0.0
        %1420 = vmatpush1.msra.mxu0 0.0
        %1421 = vmatprep.subr.mxu0 0.0
        %1422 = vmatpush1.msra.mxu0 0.0
        %1423 = vmatprep.subr.mxu0 0.0
        %1424 = vmatpush1.msra.mxu0 0.0
        %1425 = vmatprep.subr.mxu0 0.0
        %1426 = vmatpush1.msra.mxu0 0.0
        %1427 = vmatprep.subr.mxu0 0.0
        %1428 = vmatpush1.msra.mxu0 0.0
        %1429 = vmatprep.subr.mxu0 0.0
        %1430 = vmatpush1.msra.mxu0 0.0
        %1431 = vmatprep.subr.mxu0 0.0
        %1432 = vmatpush1.msra.mxu0 %v1403
        %1433 = vmatprep.subr.mxu0 0.0
        %1434 = vmatpush1.msra.mxu0 %v1402
        %1435 = vmatprep.subr.mxu0 0.0
        %1436 = vmatpush1.msra.mxu0 %v1401
        %1437 = vmatprep.subr.mxu0 0.0
        %1438 = vmatpush1.msra.mxu0 %v1400
        %1439 = vmatprep.subr.mxu0 0.0
        %1440 = vmatpush2.msra.mxu0 0.0
        %1441 = vmatprep.subr.mxu0 0.0
        %1442 = vmatpush2.msra.mxu0 0.0
        %1443 = vmatprep.subr.mxu0 0.0
        %1444 = vmatpush2.msra.mxu0 0.0
        %1445 = vmatprep.subr.mxu0 0.0
        %1446 = vmatpush2.msra.mxu0 0.0
        %1447 = vmatprep.subr.mxu0 0.0
        %1448 = vmatpush2.msra.mxu0 0.0
        %1449 = vmatprep.subr.mxu0 0.0
        %1450 = vmatpush2.msra.mxu0 0.0
        %1451 = vmatprep.subr.mxu0 0.0
        %1452 = vmatpush2.msra.mxu0 0.0
        %1453 = vmatprep.subr.mxu0 0.0
        %1454 = vmatpush2.msra.mxu0 0.0
        %1455 = vmatprep.subr.mxu0 0.0
        %1456 = vmatpush2.msra.mxu0 0.0
        %1457 = vmatprep.subr.mxu0 0.0
        %1458 = vmatpush2.msra.mxu0 0.0
        %1459 = vmatprep.subr.mxu0 0.0
        %1460 = vmatpush2.msra.mxu0 0.0
        %1461 = vmatprep.subr.mxu0 0.0
        %1462 = vmatpush2.msra.mxu0 0.0
        %1463 = vmatprep.subr.mxu0 0.0
        %1464 = vmatpush2.msra.mxu0 0.0
        %1465 = vmatprep.subr.mxu0 0.0
        %1466 = vmatpush2.msra.mxu0 0.0
        %1467 = vmatprep.subr.mxu0 0.0
        %1468 = vmatpush2.msra.mxu0 0.0
        %1469 = vmatprep.subr.mxu0 0.0
        %1470 = vmatpush2.msra.mxu0 0.0
        %1471 = vmatprep.mubr.f32.mxu0 0.0
        %1472 = vmatmul.mubr.f32.gmra.mxu0 %v1405
        %v1473 = vpop.f32.mrf.mxu0
        %v1474 = vadd.f32 0.0, %v1473
        %v1475 = vpop.f32.mrf.mxu0
        %1476 = vdwg.mxu0
        %1477 = vst.msk [vmem:[%s472] sm:$0xff] %vm487, %v1474
        %s1478 = sand.u32 %s220, 1
        %s1479 = scalar_lea.sflag [#allocation5], %s1478
        %s1480 = sand.u32 %s220, 1
        %s1481 = smul.addr %s1480, 8
        %s1482 = scalar_lea.vmem [#allocation15], %s1481
        %s1483 = sand.u32 %s248, 1
        %s1484 = scalar_lea.sflag [#allocation17], %s1483
        %s1485 = sand.u32 %s248, 1
        %s1486 = smul.addr %s1485, 32
        %s1487 = scalar_lea.vmem [#allocation16], %s1486
        // Predicated region
        $region77: #{tpu_custom_call.1} parent=47 // pred_check
          %p1488 = pneg %p230
        $region78: #{tpu_custom_call.1} parent=47 // pred_check_branch
          %1490 = sbr.rel (%p1488) target = $region80
        $region79: #{tpu_custom_call.1} parent=47 // pred_region
          %s1492 = ssub.s32 128, 128
          %1493 = vsyncadd %s1479, %s1492
          %s1494 = sadd.s32 %s39, %s38
          %s1495 = smul.addr %s1494, 128
          %s1496 = scalar_lea.hbm %s7, %s1495
          %s1498 = sshll.u32 %s1482, 4
          %s1499 = int_to_ptr.vmem [resolvable:$true] %s1498
          %1501 = dma.vmem_to_hbm [thread:$0]  %s1499, 128, %s1496, %s1479
        $region80: #{tpu_custom_call.1} parent=47 // pred_fallthru
          _
        // Predicated region
        $region81: #{tpu_custom_call.1} parent=47 // pred_check
          %p1502 = pneg %p258
        $region82: #{tpu_custom_call.1} parent=47 // pred_check_branch
          %1504 = sbr.rel (%p1502) target = $region84
        $region83: #{tpu_custom_call.1} parent=47 // pred_region
          %s1506 = ssub.s32 512, 512
          %1507 = vsyncadd %s1484, %s1506
          %s1508 = smul.addr %s38, 4
          %s1509 = sadd.s32 %s39, %s1508
          %s1510 = smul.addr %s1509, 128
          %s1511 = scalar_lea.hbm %s8, %s1510
          %s1512 = sshll.u32 %s1487, 4
          %s1513 = int_to_ptr.vmem [resolvable:$true] %s1512
          %1518 = dma.vmem_to_hbm [thread:$0]  %s1513, 512, %s1511, %s1484, 128, 128, 8
        $region84: #{tpu_custom_call.1} parent=47 // pred_fallthru
          _
      $region48: #{tpu_custom_call.1} parent=5 // pred_fallthru
        _
      %p1519 = scmp.le.s32.totalorder 2, %s29
      // Predicated region
      $region85: #{tpu_custom_call.1} parent=5 // pred_check
        %p1520 = pneg %p1519
      $region86: #{tpu_custom_call.1} parent=5 // pred_check_branch
        %1522 = sbr.rel (%p1520) target = $region88
      $region87: #{tpu_custom_call.1} parent=5 // pred_region
        %s1523 = ssub.s32 %s29, 2
        // Predicated region
        $region89: #{tpu_custom_call.1} parent=87 // pred_check
          %p1524 = pneg %p236
        $region90: #{tpu_custom_call.1} parent=87 // pred_check_branch
          %1526 = sbr.rel (%p1524) target = $region92
        $region91: #{tpu_custom_call.1} parent=87 // pred_region
          %s1527 = sand.u32 %s221, 1
          %s1528 = scalar_lea.sflag [#allocation5], %s1527
          %s1529 = sand.u32 %s221, 1
          %s1530 = smul.addr %s1529, 8
          %s1531 = scalar_lea.vmem [#allocation15], %s1530
          %1532 = dma.done %s1528, 128
        $region92: #{tpu_custom_call.1} parent=87 // pred_fallthru
          _
        // Predicated region
        $region93: #{tpu_custom_call.1} parent=87 // pred_check
          %p1533 = pneg %p264
        $region94: #{tpu_custom_call.1} parent=87 // pred_check_branch
          %1535 = sbr.rel (%p1533) target = $region96
        $region95: #{tpu_custom_call.1} parent=87 // pred_region
          %s1536 = sand.u32 %s249, 1
          %s1537 = scalar_lea.sflag [#allocation17], %s1536
          %s1538 = sand.u32 %s249, 1
          %s1539 = smul.addr %s1538, 32
          %s1540 = scalar_lea.vmem [#allocation16], %s1539
          %1541 = dma.done %s1537, 512
        $region96: #{tpu_custom_call.1} parent=87 // pred_fallthru
          _
      $region88: #{tpu_custom_call.1} parent=5 // pred_fallthru
        _
    $region6: #{tpu_custom_call.1} parent=1 // loop_footer
      %s33 = sadd.s32 1, %s29
    $region7: #{tpu_custom_call.1} parent=1 // loop_footer_branch
      %28 = sbr.rel target = $region3
    $region8: #{tpu_custom_call.1} parent=1 // loop_exit
      _
    %1542 = vsyncpa [#allocation4], 1
    %s1543 = scalar_lea.sflag [#allocation4], 1
    %1544 = vsyncpa %s1543, 1
    %1545 = vsyncpa [#allocation7], 1
    %s1546 = scalar_lea.sflag [#allocation7], 1
    %1547 = vsyncpa %s1546, 1
    %1548 = vsyncpa [#allocation10], 1
    %1549 = vsyncpa [#allocation13], 1
    %1550 = vsyncpa [#allocation5], 1
    %s1551 = scalar_lea.sflag [#allocation5], 1
    %1552 = vsyncpa %s1551, 1
    %1553 = vsyncpa [#allocation17], 1
    %s1554 = scalar_lea.sflag [#allocation17], 1
    %1555 = vsyncpa %s1554, 1

</llo_original>
